<compile_context>
chip_gen: v7x
topology: tpu7x:2x2x1
jax: 0.10.0
libtpu: 0.0.40
codegen_flags: <defaults>
</compile_context>

<pallas_src>
import functools

import jax
import jax.numpy as jnp
from jax.experimental import pallas as pl
from jax.experimental.pallas import tpu as pltpu


# ----------------------------------------------------------------------------
# Kernel 1: fused patch-embedding  (patch matmul + CLS/pos add + pre-LayerNorm)
# ----------------------------------------------------------------------------
def _embed_kernel(patches_ref, pw_ref, add_ref, g_ref, b_ref, o_ref, *, eps):
    x = jnp.dot(patches_ref[...].astype(pw_ref.dtype), pw_ref[...],
                preferred_element_type=jnp.float32)
    x = x + add_ref[...].astype(jnp.float32)          # class + position embeddings
    mu = jnp.mean(x, axis=-1, keepdims=True)
    var = jnp.mean(jnp.square(x - mu), axis=-1, keepdims=True)
    y = (x - mu) * jax.lax.rsqrt(var + eps)
    o_ref[...] = (y * g_ref[...].astype(jnp.float32)
                  + b_ref[...].astype(jnp.float32)).astype(o_ref.dtype)


def embed(patches_full, patch_w, add_full, pre_g, pre_b, eps=1e-5):
    M = patches_full.shape[0]
    D = patch_w.shape[1]
    return pl.pallas_call(
        functools.partial(_embed_kernel, eps=eps),
        out_shape=jax.ShapeDtypeStruct((M, D), jnp.float32),
    )(patches_full, patch_w, add_full, pre_g.reshape(1, D), pre_b.reshape(1, D))


# ----------------------------------------------------------------------------
# Kernel 2: the whole 24-layer CLIP encoder as ONE pallas_call (grid over layers)
# ----------------------------------------------------------------------------
def _encoder_kernel(h0_ref, mask_ref,
                    ln1_g_ref, ln1_b_ref, qkv_w_ref, qkv_b_ref,
                    ow_ref, ob_ref, ln2_g_ref, ln2_b_ref,
                    fc1_w_ref, fc1_b_ref, fc2_w_ref, fc2_b_ref,
                    out_a_ref, out_b_ref,
                    h_scr,
                    *, heads, head_dim, scale, eps, write_a, write_b):
    layer = pl.program_id(0)
    D = heads * head_dim
    cdt = qkv_w_ref.dtype                              # matmul compute dtype (bf16)

    @pl.when(layer == 0)
    def _():
        h_scr[...] = h0_ref[...].astype(jnp.float32)

    def layernorm(x, g_ref, b_ref):
        mu = jnp.mean(x, axis=-1, keepdims=True)
        var = jnp.mean(jnp.square(x - mu), axis=-1, keepdims=True)
        y = (x - mu) * jax.lax.rsqrt(var + eps)
        return y * g_ref[0].astype(jnp.float32) + b_ref[0].astype(jnp.float32)

    h = h_scr[...]                                     # (M, D) f32, resident in VMEM

    # --------------------- self-attention block ---------------------
    y = layernorm(h, ln1_g_ref, ln1_b_ref)
    qkv = jnp.dot(y.astype(cdt), qkv_w_ref[0],
                  preferred_element_type=jnp.float32)
    qkv = qkv + qkv_b_ref[0].astype(jnp.float32)       # (M, 3D)
    mask = mask_ref[...]                               # additive mask: 0 / -1e30
    ow = ow_ref[0]                                     # (D, D)

    attn = jnp.zeros(h.shape, jnp.float32)
    for hh in range(heads):                            # static unroll, tiny head count
        lo = hh * head_dim
        hi = lo + head_dim
        q = qkv[:, lo:hi] * scale
        k = qkv[:, D + lo:D + hi]
        v = qkv[:, 2 * D + lo:2 * D + hi]
        s = jax.lax.dot_general(q.astype(cdt), k.astype(cdt),
                                (((1,), (1,)), ((), ())),
                                preferred_element_type=jnp.float32)   # (M, M)
        s = s + mask                                   # block cross-image attention
        s = s - jnp.max(s, axis=-1, keepdims=True)
        p = jnp.exp(s)
        p = p * pl.reciprocal(jnp.sum(p, axis=-1, keepdims=True), approx=True)
        o_h = jnp.dot(p.astype(cdt), v.astype(cdt),
                      preferred_element_type=jnp.float32)             # (M, Dh)
        # sum_h (head_out_h @ o_w[rows of head h]) == concat(heads) @ o_w
        attn = attn + jnp.dot(o_h.astype(cdt), ow[lo:hi, :],
                              preferred_element_type=jnp.float32)
    attn = attn + ob_ref[0].astype(jnp.float32)
    h = h + attn                                       # residual

    # --------------------------- MLP block ---------------------------
    y = layernorm(h, ln2_g_ref, ln2_b_ref)
    z = jnp.dot(y.astype(cdt), fc1_w_ref[0],
                preferred_element_type=jnp.float32) + fc1_b_ref[0].astype(jnp.float32)
    z = z * jax.nn.sigmoid(1.702 * z)                  # CLIP quick-GELU
    z = jnp.dot(z.astype(cdt), fc2_w_ref[0],
                preferred_element_type=jnp.float32) + fc2_b_ref[0].astype(jnp.float32)
    h = h + z                                          # residual

    h_scr[...] = h

    # only the two hidden states needed by feature_select leave VMEM
    @pl.when(layer == write_a)
    def _():
        out_a_ref[...] = h.astype(out_a_ref.dtype)

    @pl.when(layer == write_b)
    def _():
        out_b_ref[...] = h.astype(out_b_ref.dtype)


def encoder(h0, mask, stack, cfg, write_layers, out_dtype):
    M, D = h0.shape
    L = cfg["layers"]
    inter = cfg["intermediate"]
    heads = cfg["heads"]
    Dh = D // heads

    def wspec(d1, d2):                                  # stacked per-layer weights
        return pl.BlockSpec((1, d1, d2), lambda l: (l, 0, 0))

    grid_spec = pltpu.PrefetchScalarGridSpec(
        num_scalar_prefetch=0,
        grid=(L,),
        in_specs=[
            pl.BlockSpec((M, D), lambda l: (0, 0)),     # h0 (fetched once)
            pl.BlockSpec((M, M), lambda l: (0, 0)),     # cross-batch mask
            wspec(1, D), wspec(1, D),                   # ln1 g/b
            wspec(D, 3 * D), wspec(1, 3 * D),           # fused qkv w/b
            wspec(D, D), wspec(1, D),                   # out-proj w/b
            wspec(1, D), wspec(1, D),                   # ln2 g/b
            wspec(D, inter), wspec(1, inter),           # fc1 w/b
            wspec(inter, D), wspec(1, D),               # fc2 w/b
        ],
        out_specs=[
            pl.BlockSpec((M, D), lambda l: (0, 0)),     # hidden_states[write_a + 1]
            pl.BlockSpec((M, D), lambda l: (0, 0)),     # hidden_states[write_b + 1]
        ],
        scratch_shapes=[pltpu.VMEM((M, D), jnp.float32)],   # resident activation
    )

    kernel = functools.partial(
        _encoder_kernel, heads=heads, head_dim=Dh, scale=Dh ** -0.5, eps=1e-5,
        write_a=write_layers[0], write_b=write_layers[1])

    return pl.pallas_call(
        kernel,
        grid_spec=grid_spec,
        out_shape=[jax.ShapeDtypeStruct((M, D), out_dtype),
                   jax.ShapeDtypeStruct((M, D), out_dtype)],
        compiler_params=pltpu.CompilerParams(
            dimension_semantics=("arbitrary",)),        # layers are sequential
    )(h0, mask,
      stack["ln1_g"], stack["ln1_b"], stack["qkv_w"], stack["qkv_b"],
      stack["o_w"], stack["o_b"], stack["ln2_g"], stack["ln2_b"],
      stack["fc1_w"], stack["fc1_b"], stack["fc2_w"], stack["fc2_b"])


# --------------------------- parameter initialization ---------------------------
def init_params(key, cfg, compute_dtype=jnp.bfloat16):
    C, p, D = cfg["channels"], cfg["patch_size"], cfg["hidden"]
    inter, L = cfg["intermediate"], cfg["layers"]
    nps = cfg["image_size"] // p
    S = nps * nps + 1
    std = 0.02
    ks = jax.random.split(key, 8)

    def nrm(k, shape, dtype=jnp.float32):
        return (jax.random.normal(k, shape, jnp.float32) * std).astype(dtype)

    return {
        # conv2d(stride=patch) weight flattened to (C*p*p, D); CLIP patch conv has no bias
        "patch_w": nrm(ks[0], (C * p * p, D), compute_dtype),
        "class_emb": nrm(ks[1], (D,)),
        "pos_emb": nrm(ks[2], (S, D)),
        "pre_ln_g": jnp.ones((D,), jnp.float32),
        "pre_ln_b": jnp.zeros((D,), jnp.float32),
        "stack": {   # per-layer weights stacked along a leading layer axis
            "ln1_g": jnp.ones((L, 1, D), jnp.float32),
            "ln1_b": jnp.zeros((L, 1, D), jnp.float32),
            "qkv_w": nrm(ks[3], (L, D, 3 * D), compute_dtype),
            "qkv_b": jnp.zeros((L, 1, 3 * D), jnp.float32),
            "o_w":   nrm(ks[4], (L, D, D), compute_dtype),
            "o_b":   jnp.zeros((L, 1, D), jnp.float32),
            "ln2_g": jnp.ones((L, 1, D), jnp.float32),
            "ln2_b": jnp.zeros((L, 1, D), jnp.float32),
            "fc1_w": nrm(ks[5], (L, D, inter), compute_dtype),
            "fc1_b": jnp.zeros((L, 1, inter), jnp.float32),
            "fc2_w": nrm(ks[6], (L, inter, D), compute_dtype),
            "fc2_b": jnp.zeros((L, 1, D), jnp.float32),
        },
    }


# ------------------------------- forward pass -------------------------------
def clip_vision_tower_forward(images, params, cfg):
    """CLIPVisionTower.forward (batched-tensor branch), layer_using_strategy='18',
    select_feature='patch'."""
    B, C, H, W = images.shape
    p = cfg["patch_size"]
    D = cfg["hidden"]
    nps = H // p
    npatch = nps * nps
    S = npatch + 1
    M = B * S

    x = images.astype(jnp.float32)

    # --- patchify (conv2d stride=patch == patch matmul); pure reshape/transpose glue ---
    patches = (x.reshape(B, C, nps, p, nps, p)
                 .transpose(0, 2, 4, 1, 3, 5)
                 .reshape(B, npatch, C * p * p))
    # zero "pixel" row per image for the CLS slot -> one dense matmul, no scatter
    patches_full = jnp.concatenate(
        [jnp.zeros((B, 1, C * p * p), jnp.float32), patches], axis=1
    ).reshape(M, C * p * p)

    # class embedding folded into position-embedding row 0, repeated per image
    cls_plus_pos = params["pos_emb"].at[0].add(params["class_emb"])      # (S, D)
    add_full = jnp.tile(cls_plus_pos, (B, 1))                            # (M, D), tiny

    # fused: patch matmul + class/pos add + pre-LayerNorm  (1 pallas_call)
    h0 = embed(patches_full, params["patch_w"], add_full,
               params["pre_ln_g"], params["pre_ln_b"])

    # additive attention mask keeping each image's tokens independent
    row_batch = jnp.arange(M, dtype=jnp.int32) // S
    mask = jnp.where(row_batch[:, None] == row_batch[None, :],
                     0.0, -1e30).astype(jnp.float32)

    # layer_using_strategy='18' -> select_layer=[18, 23];
    # hidden_states[i] = output of encoder layer i-1 -> write after layers 17 and 22
    feats18, feats23 = encoder(h0, mask, params["stack"], cfg,
                               write_layers=(17, 22), out_dtype=images.dtype)

    # select_feature='patch' -> drop CLS token; cast back to input dtype
    return [f.reshape(B, S, D)[:, 1:].astype(images.dtype)
            for f in (feats18, feats23)]


# ---------------------------------- main ----------------------------------
if __name__ == "__main__":
    cfg = {
        "image_size": 16,
        "patch_size": 8,
        "channels": 3,
        "hidden": 32,
        "heads": 4,
        "intermediate": 64,
        "layers": 24,   # hidden_states[23] must exist for strategy '18'
    }

    key = jax.random.PRNGKey(0)
    pkey, ikey = jax.random.split(key)
    params = init_params(pkey, cfg)

    images = jax.random.normal(
        ikey, (2, cfg["channels"], cfg["image_size"], cfg["image_size"]), jnp.float32)

    fwd = jax.jit(lambda imgs, prm: clip_vision_tower_forward(imgs, prm, cfg))
    feats = fwd(images, params)
    feats = jax.block_until_ready(feats)

    num_patches = (cfg["image_size"] // cfg["patch_size"]) ** 2
    assert len(feats) == 2
    for f in feats:
        assert f.shape == (2, num_patches, cfg["hidden"]), f.shape
        assert f.dtype == images.dtype
        assert bool(jnp.all(jnp.isfinite(f)))

    print("KERNEL_OK")
</pallas_src>

<mosaic_0001>
module attributes {stable_mosaic.version = 11 : i64} {
  func.func @_encoder_kernel(%arg0: i32, %arg1: memref<10x32xf32, #tpu.memory_space<vmem>>, %arg2: memref<10x10xf32, #tpu.memory_space<vmem>>, %arg3: memref<1x1x32xf32, #tpu.memory_space<vmem>>, %arg4: memref<1x1x32xf32, #tpu.memory_space<vmem>>, %arg5: memref<1x32x96xbf16, #tpu.memory_space<vmem>>, %arg6: memref<1x1x96xf32, #tpu.memory_space<vmem>>, %arg7: memref<1x32x32xbf16, #tpu.memory_space<vmem>>, %arg8: memref<1x1x32xf32, #tpu.memory_space<vmem>>, %arg9: memref<1x1x32xf32, #tpu.memory_space<vmem>>, %arg10: memref<1x1x32xf32, #tpu.memory_space<vmem>>, %arg11: memref<1x32x64xbf16, #tpu.memory_space<vmem>>, %arg12: memref<1x1x64xf32, #tpu.memory_space<vmem>>, %arg13: memref<1x64x32xbf16, #tpu.memory_space<vmem>>, %arg14: memref<1x1x32xf32, #tpu.memory_space<vmem>>, %arg15: memref<10x32xf32, #tpu.memory_space<vmem>>, %arg16: memref<10x32xf32, #tpu.memory_space<vmem>>, %arg17: memref<10x32xf32, #tpu.memory_space<vmem>>) attributes {dimension_semantics = [#tpu.dimension_semantics<arbitrary>], iteration_bounds = array<i64: 24>, scalar_prefetch = 0 : i64, scratch_operands = 1 : i64, tpu.core_type = #tpu.core_type<tc>, window_params = [{pipeline_mode = #tpu.pipeline_mode<synchronous>, transform_indices = @transform_0, window_bounds = array<i64: 10, 32>}, {pipeline_mode = #tpu.pipeline_mode<synchronous>, transform_indices = @transform_1, window_bounds = array<i64: 10, 10>}, {transform_indices = @transform_2, window_bounds = array<i64: 1, 1, 32>}, {transform_indices = @transform_3, window_bounds = array<i64: 1, 1, 32>}, {transform_indices = @transform_4, window_bounds = array<i64: 1, 32, 96>}, {transform_indices = @transform_5, window_bounds = array<i64: 1, 1, 96>}, {transform_indices = @transform_6, window_bounds = array<i64: 1, 32, 32>}, {transform_indices = @transform_7, window_bounds = array<i64: 1, 1, 32>}, {transform_indices = @transform_8, window_bounds = array<i64: 1, 1, 32>}, {transform_indices = @transform_9, window_bounds = array<i64: 1, 1, 32>}, {transform_indices = @transform_10, window_bounds = array<i64: 1, 32, 64>}, {transform_indices = @transform_11, window_bounds = array<i64: 1, 1, 64>}, {transform_indices = @transform_12, window_bounds = array<i64: 1, 64, 32>}, {transform_indices = @transform_13, window_bounds = array<i64: 1, 1, 32>}, {pipeline_mode = #tpu.pipeline_mode<synchronous>, transform_indices = @transform_14, window_bounds = array<i64: 10, 32>}, {pipeline_mode = #tpu.pipeline_mode<synchronous>, transform_indices = @transform_15, window_bounds = array<i64: 10, 32>}]} {
    %c0_i32 = arith.constant 0 : i32
    %0 = arith.cmpi eq, %arg0, %c0_i32 : i32
    %1 = arith.extui %0 : i1 to i32
    %c0_i32_0 = arith.constant 0 : i32
    %2 = arith.cmpi ne, %1, %c0_i32_0 : i32
    scf.if %2 {
      %c0_83 = arith.constant 0 : index
      %c0_84 = arith.constant 0 : index
      %209 = vector.load %arg1[%c0_83, %c0_84] : memref<10x32xf32, #tpu.memory_space<vmem>>, vector<10x32xf32>
      %c0_85 = arith.constant 0 : index
      %c0_86 = arith.constant 0 : index
      %210 = vector.load %arg17[%c0_85, %c0_86] : memref<10x32xf32, #tpu.memory_space<vmem>>, vector<10x32xf32>
      tpu.vector_store %arg17[%c0_85, %c0_86], %209 {strides = array<i32>} : memref<10x32xf32, #tpu.memory_space<vmem>>, vector<10x32xf32>,
    } else {
    }
    %c0 = arith.constant 0 : index
    %c0_1 = arith.constant 0 : index
    %3 = vector.load %arg17[%c0, %c0_1] : memref<10x32xf32, #tpu.memory_space<vmem>>, vector<10x32xf32>
    %cst = arith.constant dense<0.000000e+00> : vector<10xf32>
    %4 = vector.multi_reduction <add>, %3, %cst [1] : vector<10x32xf32> to vector<10xf32>
    %5 = vector.shape_cast %4 : vector<10xf32> to vector<10x1xf32>
    %cst_2 = arith.constant 3.200000e+01 : f32
    %6 = vector.broadcast %cst_2 : f32 to vector<10x1xf32>
    %7 = arith.divf %5, %6 : vector<10x1xf32>
    %8 = vector.broadcast %7 : vector<10x1xf32> to vector<10x32xf32>
    %9 = arith.subf %3, %8 : vector<10x32xf32>
    %10 = arith.mulf %9, %9 : vector<10x32xf32>
    %cst_3 = arith.constant dense<0.000000e+00> : vector<10xf32>
    %11 = vector.multi_reduction <add>, %10, %cst_3 [1] : vector<10x32xf32> to vector<10xf32>
    %12 = vector.shape_cast %11 : vector<10xf32> to vector<10x1xf32>
    %cst_4 = arith.constant 3.200000e+01 : f32
    %13 = vector.broadcast %cst_4 : f32 to vector<10x1xf32>
    %14 = arith.divf %12, %13 : vector<10x1xf32>
    %15 = vector.broadcast %7 : vector<10x1xf32> to vector<10x32xf32>
    %16 = arith.subf %3, %15 : vector<10x32xf32>
    %cst_5 = arith.constant 9.99999974E-6 : f32
    %17 = vector.broadcast %cst_5 : f32 to vector<10x1xf32>
    %18 = arith.addf %14, %17 : vector<10x1xf32>
    %19 = math.rsqrt %18 : vector<10x1xf32>
    %20 = vector.broadcast %19 : vector<10x1xf32> to vector<10x32xf32>
    %21 = arith.mulf %16, %20 : vector<10x32xf32>
    %c0_6 = arith.constant 0 : index
    %c0_7 = arith.constant 0 : index
    %c0_8 = arith.constant 0 : index
    %22 = vector.load %arg3[%c0_6, %c0_7, %c0_8] : memref<1x1x32xf32, #tpu.memory_space<vmem>>, vector<1x1x32xf32>
    %23 = vector.shape_cast %22 : vector<1x1x32xf32> to vector<1x32xf32>
    %24 = vector.broadcast %23 : vector<1x32xf32> to vector<10x32xf32>
    %25 = arith.mulf %21, %24 : vector<10x32xf32>
    %c0_9 = arith.constant 0 : index
    %c0_10 = arith.constant 0 : index
    %c0_11 = arith.constant 0 : index
    %26 = vector.load %arg4[%c0_9, %c0_10, %c0_11] : memref<1x1x32xf32, #tpu.memory_space<vmem>>, vector<1x1x32xf32>
    %27 = vector.shape_cast %26 : vector<1x1x32xf32> to vector<1x32xf32>
    %28 = vector.broadcast %27 : vector<1x32xf32> to vector<10x32xf32>
    %29 = arith.addf %25, %28 : vector<10x32xf32>
    %30 = arith.truncf %29 : vector<10x32xf32> to vector<10x32xbf16>
    %c0_12 = arith.constant 0 : index
    %c0_13 = arith.constant 0 : index
    %c0_14 = arith.constant 0 : index
    %31 = vector.load %arg5[%c0_12, %c0_13, %c0_14] : memref<1x32x96xbf16, #tpu.memory_space<vmem>>, vector<1x32x96xbf16>
    %32 = vector.shape_cast %31 : vector<1x32x96xbf16> to vector<32x96xbf16>
    %cst_15 = arith.constant dense<0.000000e+00> : vector<10x96xf32>
    %33 = tpu.matmul %30, %32, %cst_15 {dimension_numbers = #tpu.dot_dimension_numbers<[1], [0], [0], [1], [0, 0, 1, 1], [], []>} : vector<10x32xbf16>, vector<32x96xbf16>, vector<10x96xf32> -> vector<10x96xf32>
    %c0_16 = arith.constant 0 : index
    %c0_17 = arith.constant 0 : index
    %c0_18 = arith.constant 0 : index
    %34 = vector.load %arg6[%c0_16, %c0_17, %c0_18] : memref<1x1x96xf32, #tpu.memory_space<vmem>>, vector<1x1x96xf32>
    %35 = vector.shape_cast %34 : vector<1x1x96xf32> to vector<1x96xf32>
    %36 = vector.broadcast %35 : vector<1x96xf32> to vector<10x96xf32>
    %37 = arith.addf %33, %36 : vector<10x96xf32>
    %c0_19 = arith.constant 0 : index
    %c0_20 = arith.constant 0 : index
    %38 = vector.load %arg2[%c0_19, %c0_20] : memref<10x10xf32, #tpu.memory_space<vmem>>, vector<10x10xf32>
    %c0_21 = arith.constant 0 : index
    %c0_22 = arith.constant 0 : index
    %c0_23 = arith.constant 0 : index
    %39 = vector.load %arg7[%c0_21, %c0_22, %c0_23] : memref<1x32x32xbf16, #tpu.memory_space<vmem>>, vector<1x32x32xbf16>
    %40 = vector.shape_cast %39 : vector<1x32x32xbf16> to vector<32x32xbf16>
    %cst_24 = arith.constant 0.000000e+00 : f32
    %41 = vector.broadcast %cst_24 : f32 to vector<10x32xf32>
    %42 = vector.extract_strided_slice %37 {offsets = [0, 0], sizes = [10, 8], strides = [1, 1]} : vector<10x96xf32> to vector<10x8xf32>
    %cst_25 = arith.constant 0.353553385 : f32
    %43 = vector.broadcast %cst_25 : f32 to vector<10x8xf32>
    %44 = arith.mulf %42, %43 : vector<10x8xf32>
    %45 = vector.extract_strided_slice %37 {offsets = [0, 32], sizes = [10, 8], strides = [1, 1]} : vector<10x96xf32> to vector<10x8xf32>
    %46 = vector.extract_strided_slice %37 {offsets = [0, 64], sizes = [10, 8], strides = [1, 1]} : vector<10x96xf32> to vector<10x8xf32>
    %47 = arith.truncf %44 : vector<10x8xf32> to vector<10x8xbf16>
    %48 = arith.truncf %45 : vector<10x8xf32> to vector<10x8xbf16>
    %cst_26 = arith.constant dense<0.000000e+00> : vector<10x10xf32>
    %49 = tpu.matmul %47, %48, %cst_26 {dimension_numbers = #tpu.dot_dimension_numbers<[1], [1], [0], [0], [0, 0, 1, 0], [], []>} : vector<10x8xbf16>, vector<10x8xbf16>, vector<10x10xf32> -> vector<10x10xf32>
    %50 = arith.addf %49, %38 : vector<10x10xf32>
    %cst_27 = arith.constant dense<0xFF800000> : vector<10xf32>
    %51 = vector.multi_reduction <maximumf>, %50, %cst_27 [1] : vector<10x10xf32> to vector<10xf32>
    %52 = vector.shape_cast %51 : vector<10xf32> to vector<10x1xf32>
    %53 = vector.broadcast %52 : vector<10x1xf32> to vector<10x10xf32>
    %54 = arith.subf %50, %53 : vector<10x10xf32>
    %55 = math.exp %54 : vector<10x10xf32>
    %cst_28 = arith.constant dense<0.000000e+00> : vector<10xf32>
    %56 = vector.multi_reduction <add>, %55, %cst_28 [1] : vector<10x10xf32> to vector<10xf32>
    %57 = vector.shape_cast %56 : vector<10xf32> to vector<10x1xf32>
    %58 = tpu.reciprocal %57 {approx = true} : vector<10x1xf32> -> vector<10x1xf32>
    %59 = vector.broadcast %58 : vector<10x1xf32> to vector<10x10xf32>
    %60 = arith.mulf %55, %59 : vector<10x10xf32>
    %61 = arith.truncf %60 : vector<10x10xf32> to vector<10x10xbf16>
    %62 = arith.truncf %46 : vector<10x8xf32> to vector<10x8xbf16>
    %cst_29 = arith.constant dense<0.000000e+00> : vector<10x8xf32>
    %63 = tpu.matmul %61, %62, %cst_29 {dimension_numbers = #tpu.dot_dimension_numbers<[1], [0], [0], [1], [0, 0, 1, 1], [], []>} : vector<10x10xbf16>, vector<10x8xbf16>, vector<10x8xf32> -> vector<10x8xf32>
    %64 = arith.truncf %63 : vector<10x8xf32> to vector<10x8xbf16>
    %65 = vector.extract_strided_slice %40 {offsets = [0, 0], sizes = [8, 32], strides = [1, 1]} : vector<32x32xbf16> to vector<8x32xbf16>
    %cst_30 = arith.constant dense<0.000000e+00> : vector<10x32xf32>
    %66 = tpu.matmul %64, %65, %cst_30 {dimension_numbers = #tpu.dot_dimension_numbers<[1], [0], [0], [1], [0, 0, 1, 1], [], []>} : vector<10x8xbf16>, vector<8x32xbf16>, vector<10x32xf32> -> vector<10x32xf32>
    %67 = arith.addf %41, %66 : vector<10x32xf32>
    %68 = vector.extract_strided_slice %37 {offsets = [0, 8], sizes = [10, 8], strides = [1, 1]} : vector<10x96xf32> to vector<10x8xf32>
    %cst_31 = arith.constant 0.353553385 : f32
    %69 = vector.broadcast %cst_31 : f32 to vector<10x8xf32>
    %70 = arith.mulf %68, %69 : vector<10x8xf32>
    %71 = vector.extract_strided_slice %37 {offsets = [0, 40], sizes = [10, 8], strides = [1, 1]} : vector<10x96xf32> to vector<10x8xf32>
    %72 = vector.extract_strided_slice %37 {offsets = [0, 72], sizes = [10, 8], strides = [1, 1]} : vector<10x96xf32> to vector<10x8xf32>
    %73 = arith.truncf %70 : vector<10x8xf32> to vector<10x8xbf16>
    %74 = arith.truncf %71 : vector<10x8xf32> to vector<10x8xbf16>
    %cst_32 = arith.constant dense<0.000000e+00> : vector<10x10xf32>
    %75 = tpu.matmul %73, %74, %cst_32 {dimension_numbers = #tpu.dot_dimension_numbers<[1], [1], [0], [0], [0, 0, 1, 0], [], []>} : vector<10x8xbf16>, vector<10x8xbf16>, vector<10x10xf32> -> vector<10x10xf32>
    %76 = arith.addf %75, %38 : vector<10x10xf32>
    %cst_33 = arith.constant dense<0xFF800000> : vector<10xf32>
    %77 = vector.multi_reduction <maximumf>, %76, %cst_33 [1] : vector<10x10xf32> to vector<10xf32>
    %78 = vector.shape_cast %77 : vector<10xf32> to vector<10x1xf32>
    %79 = vector.broadcast %78 : vector<10x1xf32> to vector<10x10xf32>
    %80 = arith.subf %76, %79 : vector<10x10xf32>
    %81 = math.exp %80 : vector<10x10xf32>
    %cst_34 = arith.constant dense<0.000000e+00> : vector<10xf32>
    %82 = vector.multi_reduction <add>, %81, %cst_34 [1] : vector<10x10xf32> to vector<10xf32>
    %83 = vector.shape_cast %82 : vector<10xf32> to vector<10x1xf32>
    %84 = tpu.reciprocal %83 {approx = true} : vector<10x1xf32> -> vector<10x1xf32>
    %85 = vector.broadcast %84 : vector<10x1xf32> to vector<10x10xf32>
    %86 = arith.mulf %81, %85 : vector<10x10xf32>
    %87 = arith.truncf %86 : vector<10x10xf32> to vector<10x10xbf16>
    %88 = arith.truncf %72 : vector<10x8xf32> to vector<10x8xbf16>
    %cst_35 = arith.constant dense<0.000000e+00> : vector<10x8xf32>
    %89 = tpu.matmul %87, %88, %cst_35 {dimension_numbers = #tpu.dot_dimension_numbers<[1], [0], [0], [1], [0, 0, 1, 1], [], []>} : vector<10x10xbf16>, vector<10x8xbf16>, vector<10x8xf32> -> vector<10x8xf32>
    %90 = arith.truncf %89 : vector<10x8xf32> to vector<10x8xbf16>
    %91 = vector.extract_strided_slice %40 {offsets = [8, 0], sizes = [8, 32], strides = [1, 1]} : vector<32x32xbf16> to vector<8x32xbf16>
    %cst_36 = arith.constant dense<0.000000e+00> : vector<10x32xf32>
    %92 = tpu.matmul %90, %91, %cst_36 {dimension_numbers = #tpu.dot_dimension_numbers<[1], [0], [0], [1], [0, 0, 1, 1], [], []>} : vector<10x8xbf16>, vector<8x32xbf16>, vector<10x32xf32> -> vector<10x32xf32>
    %93 = arith.addf %67, %92 : vector<10x32xf32>
    %94 = vector.extract_strided_slice %37 {offsets = [0, 16], sizes = [10, 8], strides = [1, 1]} : vector<10x96xf32> to vector<10x8xf32>
    %cst_37 = arith.constant 0.353553385 : f32
    %95 = vector.broadcast %cst_37 : f32 to vector<10x8xf32>
    %96 = arith.mulf %94, %95 : vector<10x8xf32>
    %97 = vector.extract_strided_slice %37 {offsets = [0, 48], sizes = [10, 8], strides = [1, 1]} : vector<10x96xf32> to vector<10x8xf32>
    %98 = vector.extract_strided_slice %37 {offsets = [0, 80], sizes = [10, 8], strides = [1, 1]} : vector<10x96xf32> to vector<10x8xf32>
    %99 = arith.truncf %96 : vector<10x8xf32> to vector<10x8xbf16>
    %100 = arith.truncf %97 : vector<10x8xf32> to vector<10x8xbf16>
    %cst_38 = arith.constant dense<0.000000e+00> : vector<10x10xf32>
    %101 = tpu.matmul %99, %100, %cst_38 {dimension_numbers = #tpu.dot_dimension_numbers<[1], [1], [0], [0], [0, 0, 1, 0], [], []>} : vector<10x8xbf16>, vector<10x8xbf16>, vector<10x10xf32> -> vector<10x10xf32>
    %102 = arith.addf %101, %38 : vector<10x10xf32>
    %cst_39 = arith.constant dense<0xFF800000> : vector<10xf32>
    %103 = vector.multi_reduction <maximumf>, %102, %cst_39 [1] : vector<10x10xf32> to vector<10xf32>
    %104 = vector.shape_cast %103 : vector<10xf32> to vector<10x1xf32>
    %105 = vector.broadcast %104 : vector<10x1xf32> to vector<10x10xf32>
    %106 = arith.subf %102, %105 : vector<10x10xf32>
    %107 = math.exp %106 : vector<10x10xf32>
    %cst_40 = arith.constant dense<0.000000e+00> : vector<10xf32>
    %108 = vector.multi_reduction <add>, %107, %cst_40 [1] : vector<10x10xf32> to vector<10xf32>
    %109 = vector.shape_cast %108 : vector<10xf32> to vector<10x1xf32>
    %110 = tpu.reciprocal %109 {approx = true} : vector<10x1xf32> -> vector<10x1xf32>
    %111 = vector.broadcast %110 : vector<10x1xf32> to vector<10x10xf32>
    %112 = arith.mulf %107, %111 : vector<10x10xf32>
    %113 = arith.truncf %112 : vector<10x10xf32> to vector<10x10xbf16>
    %114 = arith.truncf %98 : vector<10x8xf32> to vector<10x8xbf16>
    %cst_41 = arith.constant dense<0.000000e+00> : vector<10x8xf32>
    %115 = tpu.matmul %113, %114, %cst_41 {dimension_numbers = #tpu.dot_dimension_numbers<[1], [0], [0], [1], [0, 0, 1, 1], [], []>} : vector<10x10xbf16>, vector<10x8xbf16>, vector<10x8xf32> -> vector<10x8xf32>
    %116 = arith.truncf %115 : vector<10x8xf32> to vector<10x8xbf16>
    %117 = vector.extract_strided_slice %40 {offsets = [16, 0], sizes = [8, 32], strides = [1, 1]} : vector<32x32xbf16> to vector<8x32xbf16>
    %cst_42 = arith.constant dense<0.000000e+00> : vector<10x32xf32>
    %118 = tpu.matmul %116, %117, %cst_42 {dimension_numbers = #tpu.dot_dimension_numbers<[1], [0], [0], [1], [0, 0, 1, 1], [], []>} : vector<10x8xbf16>, vector<8x32xbf16>, vector<10x32xf32> -> vector<10x32xf32>
    %119 = arith.addf %93, %118 : vector<10x32xf32>
    %120 = vector.extract_strided_slice %37 {offsets = [0, 24], sizes = [10, 8], strides = [1, 1]} : vector<10x96xf32> to vector<10x8xf32>
    %cst_43 = arith.constant 0.353553385 : f32
    %121 = vector.broadcast %cst_43 : f32 to vector<10x8xf32>
    %122 = arith.mulf %120, %121 : vector<10x8xf32>
    %123 = vector.extract_strided_slice %37 {offsets = [0, 56], sizes = [10, 8], strides = [1, 1]} : vector<10x96xf32> to vector<10x8xf32>
    %124 = vector.extract_strided_slice %37 {offsets = [0, 88], sizes = [10, 8], strides = [1, 1]} : vector<10x96xf32> to vector<10x8xf32>
    %125 = arith.truncf %122 : vector<10x8xf32> to vector<10x8xbf16>
    %126 = arith.truncf %123 : vector<10x8xf32> to vector<10x8xbf16>
    %cst_44 = arith.constant dense<0.000000e+00> : vector<10x10xf32>
    %127 = tpu.matmul %125, %126, %cst_44 {dimension_numbers = #tpu.dot_dimension_numbers<[1], [1], [0], [0], [0, 0, 1, 0], [], []>} : vector<10x8xbf16>, vector<10x8xbf16>, vector<10x10xf32> -> vector<10x10xf32>
    %128 = arith.addf %127, %38 : vector<10x10xf32>
    %cst_45 = arith.constant dense<0xFF800000> : vector<10xf32>
    %129 = vector.multi_reduction <maximumf>, %128, %cst_45 [1] : vector<10x10xf32> to vector<10xf32>
    %130 = vector.shape_cast %129 : vector<10xf32> to vector<10x1xf32>
    %131 = vector.broadcast %130 : vector<10x1xf32> to vector<10x10xf32>
    %132 = arith.subf %128, %131 : vector<10x10xf32>
    %133 = math.exp %132 : vector<10x10xf32>
    %cst_46 = arith.constant dense<0.000000e+00> : vector<10xf32>
    %134 = vector.multi_reduction <add>, %133, %cst_46 [1] : vector<10x10xf32> to vector<10xf32>
    %135 = vector.shape_cast %134 : vector<10xf32> to vector<10x1xf32>
    %136 = tpu.reciprocal %135 {approx = true} : vector<10x1xf32> -> vector<10x1xf32>
    %137 = vector.broadcast %136 : vector<10x1xf32> to vector<10x10xf32>
    %138 = arith.mulf %133, %137 : vector<10x10xf32>
    %139 = arith.truncf %138 : vector<10x10xf32> to vector<10x10xbf16>
    %140 = arith.truncf %124 : vector<10x8xf32> to vector<10x8xbf16>
    %cst_47 = arith.constant dense<0.000000e+00> : vector<10x8xf32>
    %141 = tpu.matmul %139, %140, %cst_47 {dimension_numbers = #tpu.dot_dimension_numbers<[1], [0], [0], [1], [0, 0, 1, 1], [], []>} : vector<10x10xbf16>, vector<10x8xbf16>, vector<10x8xf32> -> vector<10x8xf32>
    %142 = arith.truncf %141 : vector<10x8xf32> to vector<10x8xbf16>
    %143 = vector.extract_strided_slice %40 {offsets = [24, 0], sizes = [8, 32], strides = [1, 1]} : vector<32x32xbf16> to vector<8x32xbf16>
    %cst_48 = arith.constant dense<0.000000e+00> : vector<10x32xf32>
    %144 = tpu.matmul %142, %143, %cst_48 {dimension_numbers = #tpu.dot_dimension_numbers<[1], [0], [0], [1], [0, 0, 1, 1], [], []>} : vector<10x8xbf16>, vector<8x32xbf16>, vector<10x32xf32> -> vector<10x32xf32>
    %145 = arith.addf %119, %144 : vector<10x32xf32>
    %c0_49 = arith.constant 0 : index
    %c0_50 = arith.constant 0 : index
    %c0_51 = arith.constant 0 : index
    %146 = vector.load %arg8[%c0_49, %c0_50, %c0_51] : memref<1x1x32xf32, #tpu.memory_space<vmem>>, vector<1x1x32xf32>
    %147 = vector.shape_cast %146 : vector<1x1x32xf32> to vector<1x32xf32>
    %148 = vector.broadcast %147 : vector<1x32xf32> to vector<10x32xf32>
    %149 = arith.addf %145, %148 : vector<10x32xf32>
    %150 = arith.addf %3, %149 : vector<10x32xf32>
    %cst_52 = arith.constant dense<0.000000e+00> : vector<10xf32>
    %151 = vector.multi_reduction <add>, %150, %cst_52 [1] : vector<10x32xf32> to vector<10xf32>
    %152 = vector.shape_cast %151 : vector<10xf32> to vector<10x1xf32>
    %cst_53 = arith.constant 3.200000e+01 : f32
    %153 = vector.broadcast %cst_53 : f32 to vector<10x1xf32>
    %154 = arith.divf %152, %153 : vector<10x1xf32>
    %155 = vector.broadcast %154 : vector<10x1xf32> to vector<10x32xf32>
    %156 = arith.subf %150, %155 : vector<10x32xf32>
    %157 = arith.mulf %156, %156 : vector<10x32xf32>
    %cst_54 = arith.constant dense<0.000000e+00> : vector<10xf32>
    %158 = vector.multi_reduction <add>, %157, %cst_54 [1] : vector<10x32xf32> to vector<10xf32>
    %159 = vector.shape_cast %158 : vector<10xf32> to vector<10x1xf32>
    %cst_55 = arith.constant 3.200000e+01 : f32
    %160 = vector.broadcast %cst_55 : f32 to vector<10x1xf32>
    %161 = arith.divf %159, %160 : vector<10x1xf32>
    %162 = vector.broadcast %154 : vector<10x1xf32> to vector<10x32xf32>
    %163 = arith.subf %150, %162 : vector<10x32xf32>
    %cst_56 = arith.constant 9.99999974E-6 : f32
    %164 = vector.broadcast %cst_56 : f32 to vector<10x1xf32>
    %165 = arith.addf %161, %164 : vector<10x1xf32>
    %166 = math.rsqrt %165 : vector<10x1xf32>
    %167 = vector.broadcast %166 : vector<10x1xf32> to vector<10x32xf32>
    %168 = arith.mulf %163, %167 : vector<10x32xf32>
    %c0_57 = arith.constant 0 : index
    %c0_58 = arith.constant 0 : index
    %c0_59 = arith.constant 0 : index
    %169 = vector.load %arg9[%c0_57, %c0_58, %c0_59] : memref<1x1x32xf32, #tpu.memory_space<vmem>>, vector<1x1x32xf32>
    %170 = vector.shape_cast %169 : vector<1x1x32xf32> to vector<1x32xf32>
    %171 = vector.broadcast %170 : vector<1x32xf32> to vector<10x32xf32>
    %172 = arith.mulf %168, %171 : vector<10x32xf32>
    %c0_60 = arith.constant 0 : index
    %c0_61 = arith.constant 0 : index
    %c0_62 = arith.constant 0 : index
    %173 = vector.load %arg10[%c0_60, %c0_61, %c0_62] : memref<1x1x32xf32, #tpu.memory_space<vmem>>, vector<1x1x32xf32>
    %174 = vector.shape_cast %173 : vector<1x1x32xf32> to vector<1x32xf32>
    %175 = vector.broadcast %174 : vector<1x32xf32> to vector<10x32xf32>
    %176 = arith.addf %172, %175 : vector<10x32xf32>
    %177 = arith.truncf %176 : vector<10x32xf32> to vector<10x32xbf16>
    %c0_63 = arith.constant 0 : index
    %c0_64 = arith.constant 0 : index
    %c0_65 = arith.constant 0 : index
    %178 = vector.load %arg11[%c0_63, %c0_64, %c0_65] : memref<1x32x64xbf16, #tpu.memory_space<vmem>>, vector<1x32x64xbf16>
    %179 = vector.shape_cast %178 : vector<1x32x64xbf16> to vector<32x64xbf16>
    %cst_66 = arith.constant dense<0.000000e+00> : vector<10x64xf32>
    %180 = tpu.matmul %177, %179, %cst_66 {dimension_numbers = #tpu.dot_dimension_numbers<[1], [0], [0], [1], [0, 0, 1, 1], [], []>} : vector<10x32xbf16>, vector<32x64xbf16>, vector<10x64xf32> -> vector<10x64xf32>
    %c0_67 = arith.constant 0 : index
    %c0_68 = arith.constant 0 : index
    %c0_69 = arith.constant 0 : index
    %181 = vector.load %arg12[%c0_67, %c0_68, %c0_69] : memref<1x1x64xf32, #tpu.memory_space<vmem>>, vector<1x1x64xf32>
    %182 = vector.shape_cast %181 : vector<1x1x64xf32> to vector<1x64xf32>
    %183 = vector.broadcast %182 : vector<1x64xf32> to vector<10x64xf32>
    %184 = arith.addf %180, %183 : vector<10x64xf32>
    %cst_70 = arith.constant 1.702000e+00 : f32
    %185 = vector.broadcast %cst_70 : f32 to vector<10x64xf32>
    %186 = arith.mulf %185, %184 : vector<10x64xf32>
    %187 = arith.negf %186 : vector<10x64xf32>
    %188 = math.exp %187 : vector<10x64xf32>
    %cst_71 = arith.constant 1.000000e+00 : f32
    %189 = vector.broadcast %cst_71 : f32 to vector<10x64xf32>
    %190 = arith.addf %189, %188 : vector<10x64xf32>
    %191 = arith.divf %189, %190 : vector<10x64xf32>
    %192 = arith.mulf %184, %191 : vector<10x64xf32>
    %193 = arith.truncf %192 : vector<10x64xf32> to vector<10x64xbf16>
    %c0_72 = arith.constant 0 : index
    %c0_73 = arith.constant 0 : index
    %c0_74 = arith.constant 0 : index
    %194 = vector.load %arg13[%c0_72, %c0_73, %c0_74] : memref<1x64x32xbf16, #tpu.memory_space<vmem>>, vector<1x64x32xbf16>
    %195 = vector.shape_cast %194 : vector<1x64x32xbf16> to vector<64x32xbf16>
    %cst_75 = arith.constant dense<0.000000e+00> : vector<10x32xf32>
    %196 = tpu.matmul %193, %195, %cst_75 {dimension_numbers = #tpu.dot_dimension_numbers<[1], [0], [0], [1], [0, 0, 1, 1], [], []>} : vector<10x64xbf16>, vector<64x32xbf16>, vector<10x32xf32> -> vector<10x32xf32>
    %c0_76 = arith.constant 0 : index
    %c0_77 = arith.constant 0 : index
    %c0_78 = arith.constant 0 : index
    %197 = vector.load %arg14[%c0_76, %c0_77, %c0_78] : memref<1x1x32xf32, #tpu.memory_space<vmem>>, vector<1x1x32xf32>
    %198 = vector.shape_cast %197 : vector<1x1x32xf32> to vector<1x32xf32>
    %199 = vector.broadcast %198 : vector<1x32xf32> to vector<10x32xf32>
    %200 = arith.addf %196, %199 : vector<10x32xf32>
    %201 = arith.addf %150, %200 : vector<10x32xf32>
    %c0_79 = arith.constant 0 : index
    %c0_80 = arith.constant 0 : index
    %202 = vector.load %arg17[%c0_79, %c0_80] : memref<10x32xf32, #tpu.memory_space<vmem>>, vector<10x32xf32>
    tpu.vector_store %arg17[%c0_79, %c0_80], %201 {strides = array<i32>} : memref<10x32xf32, #tpu.memory_space<vmem>>, vector<10x32xf32>,
    %c17_i32 = arith.constant 17 : i32
    %203 = arith.cmpi eq, %arg0, %c17_i32 : i32
    %204 = arith.extui %203 : i1 to i32
    %c0_i32_81 = arith.constant 0 : i32
    %205 = arith.cmpi ne, %204, %c0_i32_81 : i32
    scf.if %205 {
      %c0_83 = arith.constant 0 : index
      %c0_84 = arith.constant 0 : index
      %209 = vector.load %arg15[%c0_83, %c0_84] : memref<10x32xf32, #tpu.memory_space<vmem>>, vector<10x32xf32>
      tpu.vector_store %arg15[%c0_83, %c0_84], %201 {strides = array<i32>} : memref<10x32xf32, #tpu.memory_space<vmem>>, vector<10x32xf32>,
    } else {
    }
    %c22_i32 = arith.constant 22 : i32
    %206 = arith.cmpi eq, %arg0, %c22_i32 : i32
    %207 = arith.extui %206 : i1 to i32
    %c0_i32_82 = arith.constant 0 : i32
    %208 = arith.cmpi ne, %207, %c0_i32_82 : i32
    scf.if %208 {
      %c0_83 = arith.constant 0 : index
      %c0_84 = arith.constant 0 : index
      %209 = vector.load %arg16[%c0_83, %c0_84] : memref<10x32xf32, #tpu.memory_space<vmem>>, vector<10x32xf32>
      tpu.vector_store %arg16[%c0_83, %c0_84], %201 {strides = array<i32>} : memref<10x32xf32, #tpu.memory_space<vmem>>, vector<10x32xf32>,
    } else {
    }
    return
  }
  func.func @transform_0(%arg0: i32) -> (i32, i32) {
    %c0_i32 = arith.constant 0 : i32
    %c0_i32_0 = arith.constant 0 : i32
    %c0_i32_1 = arith.constant 0 : i32
    return %c0_i32, %c0_i32_0 : i32, i32
  }
  func.func @transform_1(%arg0: i32) -> (i32, i32) {
    %c0_i32 = arith.constant 0 : i32
    %c0_i32_0 = arith.constant 0 : i32
    %c0_i32_1 = arith.constant 0 : i32
    return %c0_i32, %c0_i32_0 : i32, i32
  }
  func.func @transform_2(%arg0: i32) -> (i32, i32, i32) {
    %c0_i32 = arith.constant 0 : i32
    %c0_i32_0 = arith.constant 0 : i32
    %c0_i32_1 = arith.constant 0 : i32
    return %arg0, %c0_i32, %c0_i32_0 : i32, i32, i32
  }
  func.func @transform_3(%arg0: i32) -> (i32, i32, i32) {
    %c0_i32 = arith.constant 0 : i32
    %c0_i32_0 = arith.constant 0 : i32
    %c0_i32_1 = arith.constant 0 : i32
    return %arg0, %c0_i32, %c0_i32_0 : i32, i32, i32
  }
  func.func @transform_4(%arg0: i32) -> (i32, i32, i32) {
    %c0_i32 = arith.constant 0 : i32
    %c0_i32_0 = arith.constant 0 : i32
    %c0_i32_1 = arith.constant 0 : i32
    return %arg0, %c0_i32, %c0_i32_0 : i32, i32, i32
  }
  func.func @transform_5(%arg0: i32) -> (i32, i32, i32) {
    %c0_i32 = arith.constant 0 : i32
    %c0_i32_0 = arith.constant 0 : i32
    %c0_i32_1 = arith.constant 0 : i32
    return %arg0, %c0_i32, %c0_i32_0 : i32, i32, i32
  }
  func.func @transform_6(%arg0: i32) -> (i32, i32, i32) {
    %c0_i32 = arith.constant 0 : i32
    %c0_i32_0 = arith.constant 0 : i32
    %c0_i32_1 = arith.constant 0 : i32
    return %arg0, %c0_i32, %c0_i32_0 : i32, i32, i32
  }
  func.func @transform_7(%arg0: i32) -> (i32, i32, i32) {
    %c0_i32 = arith.constant 0 : i32
    %c0_i32_0 = arith.constant 0 : i32
    %c0_i32_1 = arith.constant 0 : i32
    return %arg0, %c0_i32, %c0_i32_0 : i32, i32, i32
  }
  func.func @transform_8(%arg0: i32) -> (i32, i32, i32) {
    %c0_i32 = arith.constant 0 : i32
    %c0_i32_0 = arith.constant 0 : i32
    %c0_i32_1 = arith.constant 0 : i32
    return %arg0, %c0_i32, %c0_i32_0 : i32, i32, i32
  }
  func.func @transform_9(%arg0: i32) -> (i32, i32, i32) {
    %c0_i32 = arith.constant 0 : i32
    %c0_i32_0 = arith.constant 0 : i32
    %c0_i32_1 = arith.constant 0 : i32
    return %arg0, %c0_i32, %c0_i32_0 : i32, i32, i32
  }
  func.func @transform_10(%arg0: i32) -> (i32, i32, i32) {
    %c0_i32 = arith.constant 0 : i32
    %c0_i32_0 = arith.constant 0 : i32
    %c0_i32_1 = arith.constant 0 : i32
    return %arg0, %c0_i32, %c0_i32_0 : i32, i32, i32
  }
  func.func @transform_11(%arg0: i32) -> (i32, i32, i32) {
    %c0_i32 = arith.constant 0 : i32
    %c0_i32_0 = arith.constant 0 : i32
    %c0_i32_1 = arith.constant 0 : i32
    return %arg0, %c0_i32, %c0_i32_0 : i32, i32, i32
  }
  func.func @transform_12(%arg0: i32) -> (i32, i32, i32) {
    %c0_i32 = arith.constant 0 : i32
    %c0_i32_0 = arith.constant 0 : i32
    %c0_i32_1 = arith.constant 0 : i32
    return %arg0, %c0_i32, %c0_i32_0 : i32, i32, i32
  }
  func.func @transform_13(%arg0: i32) -> (i32, i32, i32) {
    %c0_i32 = arith.constant 0 : i32
    %c0_i32_0 = arith.constant 0 : i32
    %c0_i32_1 = arith.constant 0 : i32
    return %arg0, %c0_i32, %c0_i32_0 : i32, i32, i32
  }
  func.func @transform_14(%arg0: i32) -> (i32, i32) {
    %c0_i32 = arith.constant 0 : i32
    %c0_i32_0 = arith.constant 0 : i32
    %c0_i32_1 = arith.constant 0 : i32
    return %c0_i32, %c0_i32_0 : i32, i32
  }
  func.func @transform_15(%arg0: i32) -> (i32, i32) {
    %c0_i32 = arith.constant 0 : i32
    %c0_i32_0 = arith.constant 0 : i32
    %c0_i32_1 = arith.constant 0 : i32
    return %c0_i32, %c0_i32_0 : i32, i32
  }
}

module attributes {stable_mosaic.version = 11 : i64} {
  func.func @_embed_kernel(%arg0: memref<10x192xf32, #tpu.memory_space<vmem>>, %arg1: memref<192x32xbf16, #tpu.memory_space<vmem>>, %arg2: memref<10x32xf32, #tpu.memory_space<vmem>>, %arg3: memref<1x32xf32, #tpu.memory_space<vmem>>, %arg4: memref<1x32xf32, #tpu.memory_space<vmem>>, %arg5: memref<10x32xf32, #tpu.memory_space<vmem>>) attributes {dimension_semantics = [], scalar_prefetch = 0 : i64, scratch_operands = 0 : i64, tpu.core_type = #tpu.core_type<tc>} {
    %c0 = arith.constant 0 : index
    %c0_0 = arith.constant 0 : index
    %0 = vector.load %arg0[%c0, %c0_0] : memref<10x192xf32, #tpu.memory_space<vmem>>, vector<10x192xf32>
    %1 = arith.truncf %0 : vector<10x192xf32> to vector<10x192xbf16>
    %c0_1 = arith.constant 0 : index
    %c0_2 = arith.constant 0 : index
    %2 = vector.load %arg1[%c0_1, %c0_2] : memref<192x32xbf16, #tpu.memory_space<vmem>>, vector<192x32xbf16>
    %cst = arith.constant dense<0.000000e+00> : vector<10x32xf32>
    %3 = tpu.matmul %1, %2, %cst {dimension_numbers = #tpu.dot_dimension_numbers<[1], [0], [0], [1], [0, 0, 1, 1], [], []>} : vector<10x192xbf16>, vector<192x32xbf16>, vector<10x32xf32> -> vector<10x32xf32>
    %c0_3 = arith.constant 0 : index
    %c0_4 = arith.constant 0 : index
    %4 = vector.load %arg2[%c0_3, %c0_4] : memref<10x32xf32, #tpu.memory_space<vmem>>, vector<10x32xf32>
    %5 = arith.addf %3, %4 : vector<10x32xf32>
    %cst_5 = arith.constant dense<0.000000e+00> : vector<10xf32>
    %6 = vector.multi_reduction <add>, %5, %cst_5 [1] : vector<10x32xf32> to vector<10xf32>
    %7 = vector.shape_cast %6 : vector<10xf32> to vector<10x1xf32>
    %cst_6 = arith.constant 3.200000e+01 : f32
    %8 = vector.broadcast %cst_6 : f32 to vector<10x1xf32>
    %9 = arith.divf %7, %8 : vector<10x1xf32>
    %10 = vector.broadcast %9 : vector<10x1xf32> to vector<10x32xf32>
    %11 = arith.subf %5, %10 : vector<10x32xf32>
    %12 = arith.mulf %11, %11 : vector<10x32xf32>
    %cst_7 = arith.constant dense<0.000000e+00> : vector<10xf32>
    %13 = vector.multi_reduction <add>, %12, %cst_7 [1] : vector<10x32xf32> to vector<10xf32>
    %14 = vector.shape_cast %13 : vector<10xf32> to vector<10x1xf32>
    %cst_8 = arith.constant 3.200000e+01 : f32
    %15 = vector.broadcast %cst_8 : f32 to vector<10x1xf32>
    %16 = arith.divf %14, %15 : vector<10x1xf32>
    %17 = vector.broadcast %9 : vector<10x1xf32> to vector<10x32xf32>
    %18 = arith.subf %5, %17 : vector<10x32xf32>
    %cst_9 = arith.constant 9.99999974E-6 : f32
    %19 = vector.broadcast %cst_9 : f32 to vector<10x1xf32>
    %20 = arith.addf %16, %19 : vector<10x1xf32>
    %21 = math.rsqrt %20 : vector<10x1xf32>
    %22 = vector.broadcast %21 : vector<10x1xf32> to vector<10x32xf32>
    %23 = arith.mulf %18, %22 : vector<10x32xf32>
    %c0_10 = arith.constant 0 : index
    %c0_11 = arith.constant 0 : index
    %24 = vector.load %arg3[%c0_10, %c0_11] : memref<1x32xf32, #tpu.memory_space<vmem>>, vector<1x32xf32>
    %25 = vector.broadcast %24 : vector<1x32xf32> to vector<10x32xf32>
    %26 = arith.mulf %23, %25 : vector<10x32xf32>
    %c0_12 = arith.constant 0 : index
    %c0_13 = arith.constant 0 : index
    %27 = vector.load %arg4[%c0_12, %c0_13] : memref<1x32xf32, #tpu.memory_space<vmem>>, vector<1x32xf32>
    %28 = vector.broadcast %27 : vector<1x32xf32> to vector<10x32xf32>
    %29 = arith.addf %26, %28 : vector<10x32xf32>
    %c0_14 = arith.constant 0 : index
    %c0_15 = arith.constant 0 : index
    %30 = vector.load %arg5[%c0_14, %c0_15] : memref<10x32xf32, #tpu.memory_space<vmem>>, vector<10x32xf32>
    tpu.vector_store %arg5[%c0_14, %c0_15], %29 {strides = array<i32>} : memref<10x32xf32, #tpu.memory_space<vmem>>, vector<10x32xf32>,
    return
  }
}

</mosaic_0001>

<llo_original>
// kernel: tile.9
$region0: #{tile.9}
  %s0 = inlined_call_operand.vmem [shape: f32[2,5,32], index: 0, kind: input, shape index: {}]
  %s1 = inlined_call_operand.vmem [shape: f32[10,32], index: 1, kind: output, shape index: {}]
  %v2 = vld [vmem:[%s0] sm:$0x1f]
  %vm3 = vcmask 261120
  %4 = vst.msk [vmem:[%s1] sm:$0x1f] %vm3, %v2
  %s5 = scalar_lea.vmem %s0, 8
  %v6 = vld [vmem:[%s5] sm:$0x1f]
  %vm7 = vcmask 261120
  %s8 = scalar_lea.vmem %s1, 5
  %9 = vst.msk [vmem:[%s8] sm:$0x1f] %vm7, %v6

// kernel: _lambda_.2
$region0: #{_lambda_.2}
  #allocation0 [shape = 'u32[]', space=smem, size = 0x4, offset = 0x4, fixed_abs, tag = 'smem constant byte address 0x4 - core index']
  #allocation1 [shape = 'u32[144,128]{1,0:T(1,128)}', space=vmem, size = 0x12000, scoped, tag = 'internal scratch']
  %s0 = inlined_call_operand.vmem [shape: f32[10,192], index: 0, kind: input, shape index: {}]
  %s1 = inlined_call_operand.vmem [shape: bf16[192,32], index: 1, kind: input, shape index: {}]
  %s2 = inlined_call_operand.vmem [shape: f32[10,32], index: 2, kind: input, shape index: {}]
  %s3 = inlined_call_operand.vmem [shape: f32[1,32], index: 3, kind: input, shape index: {}]
  %s4 = inlined_call_operand.vmem [shape: f32[1,32], index: 4, kind: input, shape index: {}]
  %s5 = inlined_call_operand.vmem [shape: f32[10,32], index: 5, kind: output, shape index: {}]
  %s6 = sld [smem:[#allocation0]]
  $region30: #{_lambda_.2} parent=0
    _
  %s8 = ssub.s32 1, %s6
  %s9 = scalar_select 0, %s8, %s6
  // Predicated region
  $region2: #{_lambda_.2} parent=0 // pred_check
    _
  $region3: #{_lambda_.2} parent=0 // pred_check_branch
    %11 = sbr.rel (0) target = $region5
  $region4: #{_lambda_.2} parent=0 // pred_region
    _
  $region5: #{_lambda_.2} parent=0 // pred_fallthru
    _
  // Predicated region
  $region6: #{_lambda_.2} parent=0 // pred_check
    _
  $region7: #{_lambda_.2} parent=0 // pred_check_branch
    %13 = sbr.rel (0) target = $region9
  $region8: #{_lambda_.2} parent=0 // pred_region
    _
  $region9: #{_lambda_.2} parent=0 // pred_fallthru
    _
  // Predicated region
  $region10: #{_lambda_.2} parent=0 // pred_check
    _
  $region11: #{_lambda_.2} parent=0 // pred_check_branch
    %15 = sbr.rel (0) target = $region13
  $region12: #{_lambda_.2} parent=0 // pred_region
    _
  $region13: #{_lambda_.2} parent=0 // pred_fallthru
    _
  // Predicated region
  $region14: #{_lambda_.2} parent=0 // pred_check
    _
  $region15: #{_lambda_.2} parent=0 // pred_check_branch
    %17 = sbr.rel (0) target = $region17
  $region16: #{_lambda_.2} parent=0 // pred_region
    _
  $region17: #{_lambda_.2} parent=0 // pred_fallthru
    _
  // Predicated region
  $region18: #{_lambda_.2} parent=0 // pred_check
    _
  $region19: #{_lambda_.2} parent=0 // pred_check_branch
    %19 = sbr.rel (0) target = $region21
  $region20: #{_lambda_.2} parent=0 // pred_region
    _
  $region21: #{_lambda_.2} parent=0 // pred_fallthru
    _
  %v21 = vld [vmem:[%s0] sm:$0xff]
  %v22 = vld [vmem:[%s0 + $0x8] sm:$0xff]
  %v23 = vld [vmem:[%s0 + $0x10] sm:$0x3]
  %v24 = vld [vmem:[%s0 + $0x18] sm:$0x3]
  %v25 = vpack.c.bf16 %v23, %v21
  %v26 = vpack.c.bf16 %v24, %v22
  %v27 = vld [vmem:[%s1] sm:$0xf]
  %v28 = vld [vmem:[%s1 + $0x4] sm:$0xf]
  %v29 = vld [vmem:[%s1 + $0x8] sm:$0xf]
  %v30 = vld [vmem:[%s1 + $0xc] sm:$0xf]
  %v31 = vld [vmem:[%s1 + $0x10] sm:$0xf]
  %v32 = vld [vmem:[%s1 + $0x14] sm:$0xf]
  %v33 = vld [vmem:[%s1 + $0x18] sm:$0xf]
  %v34 = vld [vmem:[%s1 + $0x1c] sm:$0xf]
  %v35 = vld [vmem:[%s1 + $0x20] sm:$0xf]
  %v36 = vld [vmem:[%s1 + $0x24] sm:$0xf]
  %v37 = vld [vmem:[%s1 + $0x28] sm:$0xf]
  %v38 = vld [vmem:[%s1 + $0x2c] sm:$0xf]
  %v39 = vld [vmem:[%s1 + $0x30] sm:$0xf]
  %v40 = vld [vmem:[%s1 + $0x34] sm:$0xf]
  %v41 = vld [vmem:[%s1 + $0x38] sm:$0xf]
  %v42 = vld [vmem:[%s1 + $0x3c] sm:$0xf]
  %v43 = vld [vmem:[%s1 + $0x40] sm:$0xf]
  %v44 = vld [vmem:[%s1 + $0x44] sm:$0xf]
  %v45 = vld [vmem:[%s1 + $0x48] sm:$0xf]
  %v46 = vld [vmem:[%s1 + $0x4c] sm:$0xf]
  %v47 = vld [vmem:[%s1 + $0x50] sm:$0xf]
  %v48 = vld [vmem:[%s1 + $0x54] sm:$0xf]
  %v49 = vld [vmem:[%s1 + $0x58] sm:$0xf]
  %v50 = vld [vmem:[%s1 + $0x5c] sm:$0xf]
  %v51 = vld [vmem:[%s2] sm:$0xff]
  %v52 = vld [vmem:[%s2 + $0x8] sm:$0x3]
  %v77 = vunpack.c.l.b16 %v27
  %v78 = vunpack.c.l.b16 %v28
  %v79 = vunpack.c.l.b16 %v29
  %v80 = vunpack.c.l.b16 %v30
  %v81 = vunpack.c.l.b16 %v31
  %v82 = vunpack.c.l.b16 %v32
  %v83 = vunpack.c.l.b16 %v33
  %v84 = vunpack.c.l.b16 %v34
  %v85 = vunpack.c.l.b16 %v35
  %v86 = vunpack.c.l.b16 %v36
  %v87 = vunpack.c.l.b16 %v37
  %v88 = vunpack.c.l.b16 %v38
  %v89 = vunpack.c.l.b16 %v39
  %v90 = vunpack.c.l.b16 %v40
  %v91 = vunpack.c.l.b16 %v41
  %v92 = vunpack.c.l.b16 %v42
  %v93 = vunpack.c.l.b16 %v43
  %v94 = vunpack.c.l.b16 %v44
  %v95 = vunpack.c.l.b16 %v45
  %v96 = vunpack.c.l.b16 %v46
  %v97 = vunpack.c.l.b16 %v47
  %v98 = vunpack.c.l.b16 %v48
  %v99 = vunpack.c.l.b16 %v49
  %v100 = vunpack.c.l.b16 %v50
  %v101 = vpack.c.b16 %v78, %v77
  %v102 = vpack.c.b16 %v80, %v79
  %v103 = vpack.c.b16 %v82, %v81
  %v104 = vpack.c.b16 %v84, %v83
  %v105 = vpack.c.b16 %v86, %v85
  %v106 = vpack.c.b16 %v88, %v87
  %v107 = vpack.c.b16 %v90, %v89
  %v108 = vpack.c.b16 %v92, %v91
  %v109 = vpack.c.b16 %v94, %v93
  %v110 = vpack.c.b16 %v96, %v95
  %v111 = vpack.c.b16 %v98, %v97
  %v112 = vpack.c.b16 %v100, %v99
  %vm125 = vcmask 523264
  %v127 = vsel %vm125, %v26, 0
  %129 = vmatprep.subr.bf16.mxu0 0
  %130 = vmatpush1.bf16.msra.mxu0 %v101
  %131 = vmatprep.subr.bf16.mxu0 0
  %132 = vmatpush1.bf16.msra.mxu0 %v102
  %133 = vmatprep.subr.bf16.mxu0 0
  %134 = vmatpush1.bf16.msra.mxu0 %v103
  %135 = vmatprep.subr.bf16.mxu0 0
  %136 = vmatpush1.bf16.msra.mxu0 %v104
  %137 = vmatprep.subr.bf16.mxu0 0
  %138 = vmatpush1.bf16.msra.mxu0 %v105
  %139 = vmatprep.subr.bf16.mxu0 0
  %140 = vmatpush1.bf16.msra.mxu0 %v106
  %141 = vmatprep.subr.bf16.mxu0 0
  %142 = vmatpush1.bf16.msra.mxu0 %v107
  %143 = vmatprep.subr.bf16.mxu0 0
  %144 = vmatpush1.bf16.msra.mxu0 %v108
  %145 = vmatprep.subr.bf16.mxu0 0
  %146 = vmatpush1.bf16.msra.mxu0 %v109
  %147 = vmatprep.subr.bf16.mxu0 0
  %148 = vmatpush1.bf16.msra.mxu0 %v110
  %149 = vmatprep.subr.bf16.mxu0 0
  %150 = vmatpush1.bf16.msra.mxu0 %v111
  %151 = vmatprep.subr.bf16.mxu0 0
  %152 = vmatpush1.bf16.msra.mxu0 %v112
  %153 = vmatprep.subr.bf16.mxu0 0
  %154 = vmatpush1.bf16.msra.mxu0 0
  %155 = vmatprep.subr.bf16.mxu0 0
  %156 = vmatpush1.bf16.msra.mxu0 0
  %157 = vmatprep.subr.bf16.mxu0 0
  %158 = vmatpush1.bf16.msra.mxu0 0
  %159 = vmatprep.subr.bf16.mxu0 0
  %160 = vmatpush1.bf16.msra.mxu0 0
  %161 = vmatprep.mubr.bf16.mxu0 %v127
  %162 = vmatmul.mubr.bf16.gmra.mrb[0].mxu0 %v25
  %v163 = vpop.f32.mrb[0].mxu0
  %v164 = vadd.f32 %v51, %v163
  %v165 = vpop.f32.mrb[0].mxu0
  %v166 = vpop.f32.mrb[0].mxu0
  %v167 = vadd.f32 %v52, %v166
  %v168 = vpop.f32.mrb[0].mxu0
  %169 = vdwg.mxu0
  %vm170 = vcmask 261120
  %v171 = vsel %vm170, %v164, 0.0
  %172 = vadd.xlane.f32.xlu0 %v171
  %v173 = vpop.xlane.xlu0 %172
  %vm174 = vcmask 254976
  %v175 = vsel %vm174, %v167, 0.0
  %176 = vadd.xlane.f32.xlu0 %v175
  %v177 = vpop.xlane.xlu0 %176
  %v178 = vrcp.pop 32.0
  %v179 = vmul.f32 %v173, %v178
  %v180 = vmul.f32 %v177, %v178
  %v181 = vsub.f32 %v164, %v179
  %v182 = vsub.f32 %v167, %v180
  %v183 = vmul.f32 %v181, %v181
  %v184 = vmul.f32 %v182, %v182
  %v185 = vsel %vm170, %v183, 0.0
  %186 = vadd.xlane.f32.xlu0 %v185
  %v187 = vpop.xlane.xlu0 %186
  %v188 = vsel %vm174, %v184, 0.0
  %189 = vadd.xlane.f32.xlu0 %v188
  %v190 = vpop.xlane.xlu0 %189
  %v191 = vmul.f32 %v187, %v178
  %v192 = vmul.f32 %v190, %v178
  %v193 = vadd.f32 %v191, 1e-05
  %v194 = vadd.f32 %v192, 1e-05
  %v195 = vrsqrt.pop %v193
  %v196 = vrsqrt.pop %v194
  %v197 = vmul.f32 %v181, %v195
  %v198 = vmul.f32 %v182, %v196
  %v199 = vld [vmem:[%s3] sm:$0x1]
  %v201 = vlaneseq
  %v202 = vshrl.u32 %v201, 7
  %v203 = vsub.s32 0, %v202
  %v204 = vrot.slane %v199, %v203
  %v206 = vmul.f32 %v197, %v204
  %v207 = vmul.f32 %v198, %v204
  %v208 = vld [vmem:[%s4] sm:$0x1]
  %v210 = vlaneseq
  %v211 = vshrl.u32 %v210, 7
  %v212 = vsub.s32 0, %v211
  %v213 = vrot.slane %v208, %v212
  %v215 = vadd.f32 %v206, %v213
  %v216 = vadd.f32 %v207, %v213
  %217 = vst.msk [vmem:[%s5] sm:$0xff] %vm170, %v215
  %218 = vst.msk [vmem:[%s5 + $0x8] sm:$0x3] %vm174, %v216
  // Predicated region
  $region22: #{_lambda_.2} parent=0 // pred_check
    _
  $region23: #{_lambda_.2} parent=0 // pred_check_branch
    %220 = sbr.rel (0) target = $region25
  $region24: #{_lambda_.2} parent=0 // pred_region
    _
  $region25: #{_lambda_.2} parent=0 // pred_fallthru
    _
  // Predicated region
  $region26: #{_lambda_.2} parent=0 // pred_check
    _
  $region27: #{_lambda_.2} parent=0 // pred_check_branch
    %222 = sbr.rel (0) target = $region29
  $region28: #{_lambda_.2} parent=0 // pred_region
    _
  $region29: #{_lambda_.2} parent=0 // pred_fallthru
    _

// kernel: _lambda_.3
$region0: #{_lambda_.3}
  #allocation0 [shape = 'u32[]', space=smem, size = 0x4, offset = 0x4, fixed_abs, tag = 'smem constant byte address 0x4 - core index']
  #allocation1 [shape = 'u32[144,128]{1,0:T(1,128)}', space=vmem, size = 0x12000, scoped, tag = 'internal scratch']
  #allocation2 [shape = 'f32[10,32]{1,0:T(8,128)}', space=vmem, size = 0x2000, scoped, tag = 'scratch operand']
  %s0 = inlined_call_operand.vmem [shape: f32[10,32], index: 0, kind: input, shape index: {}]
  %s1 = inlined_call_operand.vmem [shape: f32[10,10], index: 1, kind: input, shape index: {}]
  %s2 = inlined_call_operand.vmem [shape: f32[24,1,32], index: 2, kind: input, shape index: {}]
  %s3 = inlined_call_operand.vmem [shape: f32[24,1,32], index: 3, kind: input, shape index: {}]
  %s4 = inlined_call_operand.vmem [shape: bf16[24,32,96], index: 4, kind: input, shape index: {}]
  %s5 = inlined_call_operand.vmem [shape: f32[24,1,96], index: 5, kind: input, shape index: {}]
  %s6 = inlined_call_operand.vmem [shape: bf16[24,32,32], index: 6, kind: input, shape index: {}]
  %s7 = inlined_call_operand.vmem [shape: f32[24,1,32], index: 7, kind: input, shape index: {}]
  %s8 = inlined_call_operand.vmem [shape: f32[24,1,32], index: 8, kind: input, shape index: {}]
  %s9 = inlined_call_operand.vmem [shape: f32[24,1,32], index: 9, kind: input, shape index: {}]
  %s10 = inlined_call_operand.vmem [shape: bf16[24,32,64], index: 10, kind: input, shape index: {}]
  %s11 = inlined_call_operand.vmem [shape: f32[24,1,64], index: 11, kind: input, shape index: {}]
  %s12 = inlined_call_operand.vmem [shape: bf16[24,64,32], index: 12, kind: input, shape index: {}]
  %s13 = inlined_call_operand.vmem [shape: f32[24,1,32], index: 13, kind: input, shape index: {}]
  %s14 = inlined_call_operand.vmem [shape: f32[10,32], index: 14, kind: output, shape index: {0}]
  %s15 = inlined_call_operand.vmem [shape: f32[10,32], index: 15, kind: output, shape index: {1}]
  %16 = xla_tuple %s14, %s15
  %s17 = sld [smem:[#allocation0]]
  $region109: #{_lambda_.3} parent=0
    _
  %s19 = ssub.s32 1, %s17
  %s20 = scalar_select 0, %s19, %s17
  loop: start=0, step=1, limit=26
  $region2: #{_lambda_.3} parent=0 // loop_pre_header
    _
  $region3: #{_lambda_.3} parent=0 // loop_header
    %s22 = sphi 0, %s26
    %p23 = scmp.ge.s32.totalorder %s22, 26
    %s30 = sphi 0, %s30
    %s32 = sphi 0, %s30
    %s33 = sphi 0, %s32
    %s47 = sphi 0, %s33
    %s51 = sphi 0, %s51
    %s53 = sphi 0, %s51
    %s54 = sphi 0, %s53
    %s68 = sphi 0, %s54
    %s74 = sphi 0, %s76
    %s77 = sphi 0, %s74
    %s78 = sphi 0, %s77
    %s94 = sphi 0, %s78
    %s100 = sphi 0, %s102
    %s103 = sphi 0, %s100
    %s104 = sphi 0, %s103
    %s120 = sphi 0, %s104
    %s126 = sphi 0, %s128
    %s129 = sphi 0, %s126
    %s130 = sphi 0, %s129
    %s146 = sphi 0, %s130
    %s152 = sphi 0, %s154
    %s155 = sphi 0, %s152
    %s156 = sphi 0, %s155
    %s172 = sphi 0, %s156
    %s178 = sphi 0, %s180
    %s181 = sphi 0, %s178
    %s182 = sphi 0, %s181
    %s198 = sphi 0, %s182
    %s204 = sphi 0, %s206
    %s207 = sphi 0, %s204
    %s208 = sphi 0, %s207
    %s224 = sphi 0, %s208
    %s230 = sphi 0, %s232
    %s233 = sphi 0, %s230
    %s234 = sphi 0, %s233
    %s250 = sphi 0, %s234
    %s256 = sphi 0, %s258
    %s259 = sphi 0, %s256
    %s260 = sphi 0, %s259
    %s276 = sphi 0, %s260
    %s282 = sphi 0, %s284
    %s285 = sphi 0, %s282
    %s286 = sphi 0, %s285
    %s302 = sphi 0, %s286
    %s308 = sphi 0, %s310
    %s311 = sphi 0, %s308
    %s312 = sphi 0, %s311
    %s328 = sphi 0, %s312
    %s334 = sphi 0, %s336
    %s337 = sphi 0, %s334
    %s338 = sphi 0, %s337
    %s354 = sphi 0, %s338
    %s360 = sphi 0, %s362
    %s363 = sphi 0, %s360
    %s364 = sphi 0, %s363
    %s380 = sphi 0, %s364
    %s384 = sphi 0, %s384
    %s386 = sphi 0, %s384
    %s387 = sphi 0, %s386
    %s401 = sphi 0, %s387
    %s405 = sphi 0, %s405
    %s407 = sphi 0, %s405
    %s408 = sphi 0, %s407
    %s422 = sphi 0, %s408
  $region4: #{_lambda_.3} parent=0 // loop_header_branch
    %25 = sbr.rel (%p23) target = $region8
  $region5: #{_lambda_.3} parent=0 // loop_body
    %s27 = ssub.s32 %s22, 1
    %s28 = ssub.s32 %s22, 2
    %s29 = sadd.s32 %s22, 1
    %s31 = sadd.s32 %s30, 1
    %p34 = scmp.eq.s32.totalorder %s22, 23
    %p35 = scmp.ne.s32.totalorder %s30, %s32
    %p36 = scmp.eq.s32.totalorder %s22, 0
    %p37 = por %p35, %p36
    %p38 = scmp.ne.s32.totalorder %s30, %s32
    %p39 = scmp.eq.s32.totalorder %s27, 23
    %p40 = por %p38, %p39
    %p41 = scmp.ne.s32.totalorder %s32, %s33
    %p42 = scmp.eq.s32.totalorder %s27, 0
    %p43 = por %p41, %p42
    %p44 = scmp.ne.s32.totalorder %s32, %s33
    %p45 = scmp.eq.s32.totalorder %s28, 23
    %p46 = por %p44, %p45
    %p48 = scmp.ne.s32.totalorder %s33, %s47
    %p49 = scmp.eq.s32.totalorder %s28, 0
    %p50 = por %p48, %p49
    %s52 = sadd.s32 %s51, 1
    %p55 = scmp.eq.s32.totalorder %s22, 23
    %p56 = scmp.ne.s32.totalorder %s51, %s53
    %p57 = scmp.eq.s32.totalorder %s22, 0
    %p58 = por %p56, %p57
    %p59 = scmp.ne.s32.totalorder %s51, %s53
    %p60 = scmp.eq.s32.totalorder %s27, 23
    %p61 = por %p59, %p60
    %p62 = scmp.ne.s32.totalorder %s53, %s54
    %p63 = scmp.eq.s32.totalorder %s27, 0
    %p64 = por %p62, %p63
    %p65 = scmp.ne.s32.totalorder %s53, %s54
    %p66 = scmp.eq.s32.totalorder %s28, 23
    %p67 = por %p65, %p66
    %p69 = scmp.ne.s32.totalorder %s54, %s68
    %p70 = scmp.eq.s32.totalorder %s28, 0
    %p71 = por %p69, %p70
    %s72 = ssub.s32 %s22, %s29
    %p73 = scmp.eq.s32.totalorder %s72, 0
    %s75 = sadd.s32 %s74, 1
    %s76 = scalar_select %p73, %s74, %s75
    %p79 = pneg %p73
    %p80 = scmp.eq.s32.totalorder %s22, 23
    %p81 = por %p79, %p80
    %p82 = scmp.ne.s32.totalorder %s74, %s77
    %p83 = scmp.eq.s32.totalorder %s22, 0
    %p84 = por %p82, %p83
    %p85 = scmp.ne.s32.totalorder %s74, %s77
    %p86 = scmp.eq.s32.totalorder %s27, 23
    %p87 = por %p85, %p86
    %p88 = scmp.ne.s32.totalorder %s77, %s78
    %p89 = scmp.eq.s32.totalorder %s27, 0
    %p90 = por %p88, %p89
    %p91 = scmp.ne.s32.totalorder %s77, %s78
    %p92 = scmp.eq.s32.totalorder %s28, 23
    %p93 = por %p91, %p92
    %p95 = scmp.ne.s32.totalorder %s78, %s94
    %p96 = scmp.eq.s32.totalorder %s28, 0
    %p97 = por %p95, %p96
    %s98 = ssub.s32 %s22, %s29
    %p99 = scmp.eq.s32.totalorder %s98, 0
    %s101 = sadd.s32 %s100, 1
    %s102 = scalar_select %p99, %s100, %s101
    %p105 = pneg %p99
    %p106 = scmp.eq.s32.totalorder %s22, 23
    %p107 = por %p105, %p106
    %p108 = scmp.ne.s32.totalorder %s100, %s103
    %p109 = scmp.eq.s32.totalorder %s22, 0
    %p110 = por %p108, %p109
    %p111 = scmp.ne.s32.totalorder %s100, %s103
    %p112 = scmp.eq.s32.totalorder %s27, 23
    %p113 = por %p111, %p112
    %p114 = scmp.ne.s32.totalorder %s103, %s104
    %p115 = scmp.eq.s32.totalorder %s27, 0
    %p116 = por %p114, %p115
    %p117 = scmp.ne.s32.totalorder %s103, %s104
    %p118 = scmp.eq.s32.totalorder %s28, 23
    %p119 = por %p117, %p118
    %p121 = scmp.ne.s32.totalorder %s104, %s120
    %p122 = scmp.eq.s32.totalorder %s28, 0
    %p123 = por %p121, %p122
    %s124 = ssub.s32 %s22, %s29
    %p125 = scmp.eq.s32.totalorder %s124, 0
    %s127 = sadd.s32 %s126, 1
    %s128 = scalar_select %p125, %s126, %s127
    %p131 = pneg %p125
    %p132 = scmp.eq.s32.totalorder %s22, 23
    %p133 = por %p131, %p132
    %p134 = scmp.ne.s32.totalorder %s126, %s129
    %p135 = scmp.eq.s32.totalorder %s22, 0
    %p136 = por %p134, %p135
    %p137 = scmp.ne.s32.totalorder %s126, %s129
    %p138 = scmp.eq.s32.totalorder %s27, 23
    %p139 = por %p137, %p138
    %p140 = scmp.ne.s32.totalorder %s129, %s130
    %p141 = scmp.eq.s32.totalorder %s27, 0
    %p142 = por %p140, %p141
    %p143 = scmp.ne.s32.totalorder %s129, %s130
    %p144 = scmp.eq.s32.totalorder %s28, 23
    %p145 = por %p143, %p144
    %p147 = scmp.ne.s32.totalorder %s130, %s146
    %p148 = scmp.eq.s32.totalorder %s28, 0
    %p149 = por %p147, %p148
    %s150 = ssub.s32 %s22, %s29
    %p151 = scmp.eq.s32.totalorder %s150, 0
    %s153 = sadd.s32 %s152, 1
    %s154 = scalar_select %p151, %s152, %s153
    %p157 = pneg %p151
    %p158 = scmp.eq.s32.totalorder %s22, 23
    %p159 = por %p157, %p158
    %p160 = scmp.ne.s32.totalorder %s152, %s155
    %p161 = scmp.eq.s32.totalorder %s22, 0
    %p162 = por %p160, %p161
    %p163 = scmp.ne.s32.totalorder %s152, %s155
    %p164 = scmp.eq.s32.totalorder %s27, 23
    %p165 = por %p163, %p164
    %p166 = scmp.ne.s32.totalorder %s155, %s156
    %p167 = scmp.eq.s32.totalorder %s27, 0
    %p168 = por %p166, %p167
    %p169 = scmp.ne.s32.totalorder %s155, %s156
    %p170 = scmp.eq.s32.totalorder %s28, 23
    %p171 = por %p169, %p170
    %p173 = scmp.ne.s32.totalorder %s156, %s172
    %p174 = scmp.eq.s32.totalorder %s28, 0
    %p175 = por %p173, %p174
    %s176 = ssub.s32 %s22, %s29
    %p177 = scmp.eq.s32.totalorder %s176, 0
    %s179 = sadd.s32 %s178, 1
    %s180 = scalar_select %p177, %s178, %s179
    %p183 = pneg %p177
    %p184 = scmp.eq.s32.totalorder %s22, 23
    %p185 = por %p183, %p184
    %p186 = scmp.ne.s32.totalorder %s178, %s181
    %p187 = scmp.eq.s32.totalorder %s22, 0
    %p188 = por %p186, %p187
    %p189 = scmp.ne.s32.totalorder %s178, %s181
    %p190 = scmp.eq.s32.totalorder %s27, 23
    %p191 = por %p189, %p190
    %p192 = scmp.ne.s32.totalorder %s181, %s182
    %p193 = scmp.eq.s32.totalorder %s27, 0
    %p194 = por %p192, %p193
    %p195 = scmp.ne.s32.totalorder %s181, %s182
    %p196 = scmp.eq.s32.totalorder %s28, 23
    %p197 = por %p195, %p196
    %p199 = scmp.ne.s32.totalorder %s182, %s198
    %p200 = scmp.eq.s32.totalorder %s28, 0
    %p201 = por %p199, %p200
    %s202 = ssub.s32 %s22, %s29
    %p203 = scmp.eq.s32.totalorder %s202, 0
    %s205 = sadd.s32 %s204, 1
    %s206 = scalar_select %p203, %s204, %s205
    %p209 = pneg %p203
    %p210 = scmp.eq.s32.totalorder %s22, 23
    %p211 = por %p209, %p210
    %p212 = scmp.ne.s32.totalorder %s204, %s207
    %p213 = scmp.eq.s32.totalorder %s22, 0
    %p214 = por %p212, %p213
    %p215 = scmp.ne.s32.totalorder %s204, %s207
    %p216 = scmp.eq.s32.totalorder %s27, 23
    %p217 = por %p215, %p216
    %p218 = scmp.ne.s32.totalorder %s207, %s208
    %p219 = scmp.eq.s32.totalorder %s27, 0
    %p220 = por %p218, %p219
    %p221 = scmp.ne.s32.totalorder %s207, %s208
    %p222 = scmp.eq.s32.totalorder %s28, 23
    %p223 = por %p221, %p222
    %p225 = scmp.ne.s32.totalorder %s208, %s224
    %p226 = scmp.eq.s32.totalorder %s28, 0
    %p227 = por %p225, %p226
    %s228 = ssub.s32 %s22, %s29
    %p229 = scmp.eq.s32.totalorder %s228, 0
    %s231 = sadd.s32 %s230, 1
    %s232 = scalar_select %p229, %s230, %s231
    %p235 = pneg %p229
    %p236 = scmp.eq.s32.totalorder %s22, 23
    %p237 = por %p235, %p236
    %p238 = scmp.ne.s32.totalorder %s230, %s233
    %p239 = scmp.eq.s32.totalorder %s22, 0
    %p240 = por %p238, %p239
    %p241 = scmp.ne.s32.totalorder %s230, %s233
    %p242 = scmp.eq.s32.totalorder %s27, 23
    %p243 = por %p241, %p242
    %p244 = scmp.ne.s32.totalorder %s233, %s234
    %p245 = scmp.eq.s32.totalorder %s27, 0
    %p246 = por %p244, %p245
    %p247 = scmp.ne.s32.totalorder %s233, %s234
    %p248 = scmp.eq.s32.totalorder %s28, 23
    %p249 = por %p247, %p248
    %p251 = scmp.ne.s32.totalorder %s234, %s250
    %p252 = scmp.eq.s32.totalorder %s28, 0
    %p253 = por %p251, %p252
    %s254 = ssub.s32 %s22, %s29
    %p255 = scmp.eq.s32.totalorder %s254, 0
    %s257 = sadd.s32 %s256, 1
    %s258 = scalar_select %p255, %s256, %s257
    %p261 = pneg %p255
    %p262 = scmp.eq.s32.totalorder %s22, 23
    %p263 = por %p261, %p262
    %p264 = scmp.ne.s32.totalorder %s256, %s259
    %p265 = scmp.eq.s32.totalorder %s22, 0
    %p266 = por %p264, %p265
    %p267 = scmp.ne.s32.totalorder %s256, %s259
    %p268 = scmp.eq.s32.totalorder %s27, 23
    %p269 = por %p267, %p268
    %p270 = scmp.ne.s32.totalorder %s259, %s260
    %p271 = scmp.eq.s32.totalorder %s27, 0
    %p272 = por %p270, %p271
    %p273 = scmp.ne.s32.totalorder %s259, %s260
    %p274 = scmp.eq.s32.totalorder %s28, 23
    %p275 = por %p273, %p274
    %p277 = scmp.ne.s32.totalorder %s260, %s276
    %p278 = scmp.eq.s32.totalorder %s28, 0
    %p279 = por %p277, %p278
    %s280 = ssub.s32 %s22, %s29
    %p281 = scmp.eq.s32.totalorder %s280, 0
    %s283 = sadd.s32 %s282, 1
    %s284 = scalar_select %p281, %s282, %s283
    %p287 = pneg %p281
    %p288 = scmp.eq.s32.totalorder %s22, 23
    %p289 = por %p287, %p288
    %p290 = scmp.ne.s32.totalorder %s282, %s285
    %p291 = scmp.eq.s32.totalorder %s22, 0
    %p292 = por %p290, %p291
    %p293 = scmp.ne.s32.totalorder %s282, %s285
    %p294 = scmp.eq.s32.totalorder %s27, 23
    %p295 = por %p293, %p294
    %p296 = scmp.ne.s32.totalorder %s285, %s286
    %p297 = scmp.eq.s32.totalorder %s27, 0
    %p298 = por %p296, %p297
    %p299 = scmp.ne.s32.totalorder %s285, %s286
    %p300 = scmp.eq.s32.totalorder %s28, 23
    %p301 = por %p299, %p300
    %p303 = scmp.ne.s32.totalorder %s286, %s302
    %p304 = scmp.eq.s32.totalorder %s28, 0
    %p305 = por %p303, %p304
    %s306 = ssub.s32 %s22, %s29
    %p307 = scmp.eq.s32.totalorder %s306, 0
    %s309 = sadd.s32 %s308, 1
    %s310 = scalar_select %p307, %s308, %s309
    %p313 = pneg %p307
    %p314 = scmp.eq.s32.totalorder %s22, 23
    %p315 = por %p313, %p314
    %p316 = scmp.ne.s32.totalorder %s308, %s311
    %p317 = scmp.eq.s32.totalorder %s22, 0
    %p318 = por %p316, %p317
    %p319 = scmp.ne.s32.totalorder %s308, %s311
    %p320 = scmp.eq.s32.totalorder %s27, 23
    %p321 = por %p319, %p320
    %p322 = scmp.ne.s32.totalorder %s311, %s312
    %p323 = scmp.eq.s32.totalorder %s27, 0
    %p324 = por %p322, %p323
    %p325 = scmp.ne.s32.totalorder %s311, %s312
    %p326 = scmp.eq.s32.totalorder %s28, 23
    %p327 = por %p325, %p326
    %p329 = scmp.ne.s32.totalorder %s312, %s328
    %p330 = scmp.eq.s32.totalorder %s28, 0
    %p331 = por %p329, %p330
    %s332 = ssub.s32 %s22, %s29
    %p333 = scmp.eq.s32.totalorder %s332, 0
    %s335 = sadd.s32 %s334, 1
    %s336 = scalar_select %p333, %s334, %s335
    %p339 = pneg %p333
    %p340 = scmp.eq.s32.totalorder %s22, 23
    %p341 = por %p339, %p340
    %p342 = scmp.ne.s32.totalorder %s334, %s337
    %p343 = scmp.eq.s32.totalorder %s22, 0
    %p344 = por %p342, %p343
    %p345 = scmp.ne.s32.totalorder %s334, %s337
    %p346 = scmp.eq.s32.totalorder %s27, 23
    %p347 = por %p345, %p346
    %p348 = scmp.ne.s32.totalorder %s337, %s338
    %p349 = scmp.eq.s32.totalorder %s27, 0
    %p350 = por %p348, %p349
    %p351 = scmp.ne.s32.totalorder %s337, %s338
    %p352 = scmp.eq.s32.totalorder %s28, 23
    %p353 = por %p351, %p352
    %p355 = scmp.ne.s32.totalorder %s338, %s354
    %p356 = scmp.eq.s32.totalorder %s28, 0
    %p357 = por %p355, %p356
    %s358 = ssub.s32 %s22, %s29
    %p359 = scmp.eq.s32.totalorder %s358, 0
    %s361 = sadd.s32 %s360, 1
    %s362 = scalar_select %p359, %s360, %s361
    %p365 = pneg %p359
    %p366 = scmp.eq.s32.totalorder %s22, 23
    %p367 = por %p365, %p366
    %p368 = scmp.ne.s32.totalorder %s360, %s363
    %p369 = scmp.eq.s32.totalorder %s22, 0
    %p370 = por %p368, %p369
    %p371 = scmp.ne.s32.totalorder %s360, %s363
    %p372 = scmp.eq.s32.totalorder %s27, 23
    %p373 = por %p371, %p372
    %p374 = scmp.ne.s32.totalorder %s363, %s364
    %p375 = scmp.eq.s32.totalorder %s27, 0
    %p376 = por %p374, %p375
    %p377 = scmp.ne.s32.totalorder %s363, %s364
    %p378 = scmp.eq.s32.totalorder %s28, 23
    %p379 = por %p377, %p378
    %p381 = scmp.ne.s32.totalorder %s364, %s380
    %p382 = scmp.eq.s32.totalorder %s28, 0
    %p383 = por %p381, %p382
    %s385 = sadd.s32 %s384, 1
    %p388 = scmp.eq.s32.totalorder %s22, 23
    %p389 = scmp.ne.s32.totalorder %s384, %s386
    %p390 = scmp.eq.s32.totalorder %s22, 0
    %p391 = por %p389, %p390
    %p392 = scmp.ne.s32.totalorder %s384, %s386
    %p393 = scmp.eq.s32.totalorder %s27, 23
    %p394 = por %p392, %p393
    %p395 = scmp.ne.s32.totalorder %s386, %s387
    %p396 = scmp.eq.s32.totalorder %s27, 0
    %p397 = por %p395, %p396
    %p398 = scmp.ne.s32.totalorder %s386, %s387
    %p399 = scmp.eq.s32.totalorder %s28, 23
    %p400 = por %p398, %p399
    %p402 = scmp.ne.s32.totalorder %s387, %s401
    %p403 = scmp.eq.s32.totalorder %s28, 0
    %p404 = por %p402, %p403
    %s406 = sadd.s32 %s405, 1
    %p409 = scmp.eq.s32.totalorder %s22, 23
    %p410 = scmp.ne.s32.totalorder %s405, %s407
    %p411 = scmp.eq.s32.totalorder %s22, 0
    %p412 = por %p410, %p411
    %p413 = scmp.ne.s32.totalorder %s405, %s407
    %p414 = scmp.eq.s32.totalorder %s27, 23
    %p415 = por %p413, %p414
    %p416 = scmp.ne.s32.totalorder %s407, %s408
    %p417 = scmp.eq.s32.totalorder %s27, 0
    %p418 = por %p416, %p417
    %p419 = scmp.ne.s32.totalorder %s407, %s408
    %p420 = scmp.eq.s32.totalorder %s28, 23
    %p421 = por %p419, %p420
    %p423 = scmp.ne.s32.totalorder %s408, %s422
    %p424 = scmp.eq.s32.totalorder %s28, 0
    %p425 = por %p423, %p424
    %p426 = scmp.le.s32.totalorder 1, %s22
    %p427 = scmp.lt.s32.totalorder %s22, 25
    %p428 = pnand %p426, %p427
    %p429 = pneg %p428
    // Predicated region
    $region9: #{_lambda_.3} parent=5 // pred_check
      _
    $region10: #{_lambda_.3} parent=5 // pred_check_branch
      %431 = sbr.rel (%p428) target = $region12
    $region11: #{_lambda_.3} parent=5 // pred_region
      %s432 = ssub.s32 %s22, 1
      // Predicated region
      $region13: #{_lambda_.3} parent=11 // pred_check
        %p433 = pneg %p43
      $region14: #{_lambda_.3} parent=11 // pred_check_branch
        %435 = sbr.rel (%p433) target = $region16
      $region15: #{_lambda_.3} parent=11 // pred_region
        _
      $region16: #{_lambda_.3} parent=11 // pred_fallthru
        _
      // Predicated region
      $region17: #{_lambda_.3} parent=11 // pred_check
        %p436 = pneg %p64
      $region18: #{_lambda_.3} parent=11 // pred_check_branch
        %438 = sbr.rel (%p436) target = $region20
      $region19: #{_lambda_.3} parent=11 // pred_region
        _
      $region20: #{_lambda_.3} parent=11 // pred_fallthru
        _
    $region12: #{_lambda_.3} parent=5 // pred_fallthru
      _
    %p439 = scmp.lt.s32.totalorder %s22, 24
    // Predicated region
    $region21: #{_lambda_.3} parent=5 // pred_check
      %p440 = pneg %p439
    $region22: #{_lambda_.3} parent=5 // pred_check_branch
      %442 = sbr.rel (%p440) target = $region24
    $region23: #{_lambda_.3} parent=5 // pred_region
      // Predicated region
      $region25: #{_lambda_.3} parent=23 // pred_check
        %p443 = pneg %p84
      $region26: #{_lambda_.3} parent=23 // pred_check_branch
        %445 = sbr.rel (%p443) target = $region28
      $region27: #{_lambda_.3} parent=23 // pred_region
        %p446 = scmp.lt.s32.totalorder %s22, 23
        %s447 = scalar_select %p446, %s22, 23
        %s448 = scalar_lea.vmem %s2, %s447
      $region28: #{_lambda_.3} parent=23 // pred_fallthru
        _
      // Predicated region
      $region29: #{_lambda_.3} parent=23 // pred_check
        %p449 = pneg %p110
      $region30: #{_lambda_.3} parent=23 // pred_check_branch
        %451 = sbr.rel (%p449) target = $region32
      $region31: #{_lambda_.3} parent=23 // pred_region
        %p452 = scmp.lt.s32.totalorder %s22, 23
        %s453 = scalar_select %p452, %s22, 23
        %s454 = scalar_lea.vmem %s3, %s453
      $region32: #{_lambda_.3} parent=23 // pred_fallthru
        _
      // Predicated region
      $region33: #{_lambda_.3} parent=23 // pred_check
        %p455 = pneg %p136
      $region34: #{_lambda_.3} parent=23 // pred_check_branch
        %457 = sbr.rel (%p455) target = $region36
      $region35: #{_lambda_.3} parent=23 // pred_region
        %p458 = scmp.lt.s32.totalorder %s22, 23
        %s459 = scalar_select %p458, %s22, 23
        %s460 = smul.addr %s459, 4
        %s461 = smul.addr %s460, 4
        %s462 = scalar_lea.vmem %s4, %s461
      $region36: #{_lambda_.3} parent=23 // pred_fallthru
        _
      // Predicated region
      $region37: #{_lambda_.3} parent=23 // pred_check
        %p463 = pneg %p162
      $region38: #{_lambda_.3} parent=23 // pred_check_branch
        %465 = sbr.rel (%p463) target = $region40
      $region39: #{_lambda_.3} parent=23 // pred_region
        %p466 = scmp.lt.s32.totalorder %s22, 23
        %s467 = scalar_select %p466, %s22, 23
        %s468 = scalar_lea.vmem %s5, %s467
      $region40: #{_lambda_.3} parent=23 // pred_fallthru
        _
      // Predicated region
      $region41: #{_lambda_.3} parent=23 // pred_check
        %p469 = pneg %p188
      $region42: #{_lambda_.3} parent=23 // pred_check_branch
        %471 = sbr.rel (%p469) target = $region44
      $region43: #{_lambda_.3} parent=23 // pred_region
        %p472 = scmp.lt.s32.totalorder %s22, 23
        %s473 = scalar_select %p472, %s22, 23
        %s474 = smul.addr %s473, 4
        %s475 = smul.addr %s474, 4
        %s476 = scalar_lea.vmem %s6, %s475
      $region44: #{_lambda_.3} parent=23 // pred_fallthru
        _
      // Predicated region
      $region45: #{_lambda_.3} parent=23 // pred_check
        %p477 = pneg %p214
      $region46: #{_lambda_.3} parent=23 // pred_check_branch
        %479 = sbr.rel (%p477) target = $region48
      $region47: #{_lambda_.3} parent=23 // pred_region
        %p480 = scmp.lt.s32.totalorder %s22, 23
        %s481 = scalar_select %p480, %s22, 23
        %s482 = scalar_lea.vmem %s7, %s481
      $region48: #{_lambda_.3} parent=23 // pred_fallthru
        _
      // Predicated region
      $region49: #{_lambda_.3} parent=23 // pred_check
        %p483 = pneg %p240
      $region50: #{_lambda_.3} parent=23 // pred_check_branch
        %485 = sbr.rel (%p483) target = $region52
      $region51: #{_lambda_.3} parent=23 // pred_region
        %p486 = scmp.lt.s32.totalorder %s22, 23
        %s487 = scalar_select %p486, %s22, 23
        %s488 = scalar_lea.vmem %s8, %s487
      $region52: #{_lambda_.3} parent=23 // pred_fallthru
        _
      // Predicated region
      $region53: #{_lambda_.3} parent=23 // pred_check
        %p489 = pneg %p266
      $region54: #{_lambda_.3} parent=23 // pred_check_branch
        %491 = sbr.rel (%p489) target = $region56
      $region55: #{_lambda_.3} parent=23 // pred_region
        %p492 = scmp.lt.s32.totalorder %s22, 23
        %s493 = scalar_select %p492, %s22, 23
        %s494 = scalar_lea.vmem %s9, %s493
      $region56: #{_lambda_.3} parent=23 // pred_fallthru
        _
      // Predicated region
      $region57: #{_lambda_.3} parent=23 // pred_check
        %p495 = pneg %p292
      $region58: #{_lambda_.3} parent=23 // pred_check_branch
        %497 = sbr.rel (%p495) target = $region60
      $region59: #{_lambda_.3} parent=23 // pred_region
        %p498 = scmp.lt.s32.totalorder %s22, 23
        %s499 = scalar_select %p498, %s22, 23
        %s500 = smul.addr %s499, 4
        %s501 = smul.addr %s500, 4
        %s502 = scalar_lea.vmem %s10, %s501
      $region60: #{_lambda_.3} parent=23 // pred_fallthru
        _
      // Predicated region
      $region61: #{_lambda_.3} parent=23 // pred_check
        %p503 = pneg %p318
      $region62: #{_lambda_.3} parent=23 // pred_check_branch
        %505 = sbr.rel (%p503) target = $region64
      $region63: #{_lambda_.3} parent=23 // pred_region
        %p506 = scmp.lt.s32.totalorder %s22, 23
        %s507 = scalar_select %p506, %s22, 23
        %s508 = scalar_lea.vmem %s11, %s507
      $region64: #{_lambda_.3} parent=23 // pred_fallthru
        _
      // Predicated region
      $region65: #{_lambda_.3} parent=23 // pred_check
        %p509 = pneg %p344
      $region66: #{_lambda_.3} parent=23 // pred_check_branch
        %511 = sbr.rel (%p509) target = $region68
      $region67: #{_lambda_.3} parent=23 // pred_region
        %p512 = scmp.lt.s32.totalorder %s22, 23
        %s513 = scalar_select %p512, %s22, 23
        %s514 = smul.addr %s513, 8
        %s515 = smul.addr %s514, 4
        %s516 = scalar_lea.vmem %s12, %s515
      $region68: #{_lambda_.3} parent=23 // pred_fallthru
        _
      // Predicated region
      $region69: #{_lambda_.3} parent=23 // pred_check
        %p517 = pneg %p370
      $region70: #{_lambda_.3} parent=23 // pred_check_branch
        %519 = sbr.rel (%p517) target = $region72
      $region71: #{_lambda_.3} parent=23 // pred_region
        %p520 = scmp.lt.s32.totalorder %s22, 23
        %s521 = scalar_select %p520, %s22, 23
        %s522 = scalar_lea.vmem %s13, %s521
      $region72: #{_lambda_.3} parent=23 // pred_fallthru
        _
    $region24: #{_lambda_.3} parent=5 // pred_fallthru
      _
    %p523 = scmp.le.s32.totalorder 1, %s22
    %p524 = scmp.lt.s32.totalorder %s22, 25
    %p525 = pnand %p523, %p524
    %p526 = pneg %p525
    // Predicated region
    $region73: #{_lambda_.3} parent=5 // pred_check
      _
    $region74: #{_lambda_.3} parent=5 // pred_check_branch
      %528 = sbr.rel (%p525) target = $region76
    $region75: #{_lambda_.3} parent=5 // pred_region
      %s529 = ssub.s32 %s22, 1
      %p530 = pneg %p43
      %p531 = pneg %p40
      %p532 = pneg %p64
      %p533 = pneg %p61
      %p534 = scmp.lt.s32.totalorder %s27, 23
      %s535 = scalar_select %p534, %s27, 23
      %s536 = scalar_lea.vmem %s2, %s535
      %p537 = pneg %p90
      %p538 = pneg %p87
      %p539 = scmp.lt.s32.totalorder %s27, 23
      %s540 = scalar_select %p539, %s27, 23
      %s541 = scalar_lea.vmem %s3, %s540
      %p542 = pneg %p116
      %p543 = pneg %p113
      %p544 = scmp.lt.s32.totalorder %s27, 23
      %s545 = scalar_select %p544, %s27, 23
      %s546 = smul.addr %s545, 4
      %s547 = smul.addr %s546, 4
      %s548 = scalar_lea.vmem %s4, %s547
      %p549 = pneg %p142
      %p550 = pneg %p139
      %p551 = scmp.lt.s32.totalorder %s27, 23
      %s552 = scalar_select %p551, %s27, 23
      %s553 = scalar_lea.vmem %s5, %s552
      %p554 = pneg %p168
      %p555 = pneg %p165
      %p556 = scmp.lt.s32.totalorder %s27, 23
      %s557 = scalar_select %p556, %s27, 23
      %s558 = smul.addr %s557, 4
      %s559 = smul.addr %s558, 4
      %s560 = scalar_lea.vmem %s6, %s559
      %p561 = pneg %p194
      %p562 = pneg %p191
      %p563 = scmp.lt.s32.totalorder %s27, 23
      %s564 = scalar_select %p563, %s27, 23
      %s565 = scalar_lea.vmem %s7, %s564
      %p566 = pneg %p220
      %p567 = pneg %p217
      %p568 = scmp.lt.s32.totalorder %s27, 23
      %s569 = scalar_select %p568, %s27, 23
      %s570 = scalar_lea.vmem %s8, %s569
      %p571 = pneg %p246
      %p572 = pneg %p243
      %p573 = scmp.lt.s32.totalorder %s27, 23
      %s574 = scalar_select %p573, %s27, 23
      %s575 = scalar_lea.vmem %s9, %s574
      %p576 = pneg %p272
      %p577 = pneg %p269
      %p578 = scmp.lt.s32.totalorder %s27, 23
      %s579 = scalar_select %p578, %s27, 23
      %s580 = smul.addr %s579, 4
      %s581 = smul.addr %s580, 4
      %s582 = scalar_lea.vmem %s10, %s581
      %p583 = pneg %p298
      %p584 = pneg %p295
      %p585 = scmp.lt.s32.totalorder %s27, 23
      %s586 = scalar_select %p585, %s27, 23
      %s587 = scalar_lea.vmem %s11, %s586
      %p588 = pneg %p324
      %p589 = pneg %p321
      %p590 = scmp.lt.s32.totalorder %s27, 23
      %s591 = scalar_select %p590, %s27, 23
      %s592 = smul.addr %s591, 8
      %s593 = smul.addr %s592, 4
      %s594 = scalar_lea.vmem %s12, %s593
      %p595 = pneg %p350
      %p596 = pneg %p347
      %p597 = scmp.lt.s32.totalorder %s27, 23
      %s598 = scalar_select %p597, %s27, 23
      %s599 = scalar_lea.vmem %s13, %s598
      %p600 = pneg %p376
      %p601 = pneg %p373
      %p602 = pneg %p397
      %p603 = pneg %p394
      %p604 = pneg %p418
      %p605 = pneg %p415
      %p606 = scmp.lt.s32.totalorder %s27, 23
      %s607 = scalar_select %p606, %s27, 23
      %s608 = scalar_lea.vmem %s2, %s607
      %p609 = scmp.lt.s32.totalorder %s27, 23
      %s610 = scalar_select %p609, %s27, 23
      %s611 = scalar_lea.vmem %s3, %s610
      %p612 = scmp.lt.s32.totalorder %s27, 23
      %s613 = scalar_select %p612, %s27, 23
      %s614 = smul.addr %s613, 4
      %s615 = smul.addr %s614, 4
      %s616 = scalar_lea.vmem %s4, %s615
      %p617 = scmp.lt.s32.totalorder %s27, 23
      %s618 = scalar_select %p617, %s27, 23
      %s619 = scalar_lea.vmem %s5, %s618
      %p620 = scmp.lt.s32.totalorder %s27, 23
      %s621 = scalar_select %p620, %s27, 23
      %s622 = smul.addr %s621, 4
      %s623 = smul.addr %s622, 4
      %s624 = scalar_lea.vmem %s6, %s623
      %p625 = scmp.lt.s32.totalorder %s27, 23
      %s626 = scalar_select %p625, %s27, 23
      %s627 = scalar_lea.vmem %s7, %s626
      %p628 = scmp.lt.s32.totalorder %s27, 23
      %s629 = scalar_select %p628, %s27, 23
      %s630 = scalar_lea.vmem %s8, %s629
      %p631 = scmp.lt.s32.totalorder %s27, 23
      %s632 = scalar_select %p631, %s27, 23
      %s633 = scalar_lea.vmem %s9, %s632
      %p634 = scmp.lt.s32.totalorder %s27, 23
      %s635 = scalar_select %p634, %s27, 23
      %s636 = smul.addr %s635, 4
      %s637 = smul.addr %s636, 4
      %s638 = scalar_lea.vmem %s10, %s637
      %p639 = scmp.lt.s32.totalorder %s27, 23
      %s640 = scalar_select %p639, %s27, 23
      %s641 = scalar_lea.vmem %s11, %s640
      %p642 = scmp.lt.s32.totalorder %s27, 23
      %s643 = scalar_select %p642, %s27, 23
      %s644 = smul.addr %s643, 8
      %s645 = smul.addr %s644, 4
      %s646 = scalar_lea.vmem %s12, %s645
      %p647 = scmp.lt.s32.totalorder %s27, 23
      %s648 = scalar_select %p647, %s27, 23
      %s649 = scalar_lea.vmem %s13, %s648
      %p651 = scmp.eq.s32.totalorder %s27, 0
      // Predicated region
      $region77: #{_lambda_.3} parent=75 // pred_check
        %p652 = pneg %p651
      $region78: #{_lambda_.3} parent=75 // pred_check_branch
        %654 = sbr.rel (%p652) target = $region80
      $region79: #{_lambda_.3} parent=75 // pred_region
        %v655 = vld [vmem:[%s0] sm:$0xff]
        %v656 = vld [vmem:[%s0 + $0x8] sm:$0x3]
        %vm657 = vcmask 261120
        %658 = vst.msk [vmem:[#allocation2] sm:$0xff] %vm657, %v655
        %vm659 = vcmask 254976
        %660 = vst.msk [vmem:[#allocation2 + $0x8] sm:$0x3] %vm659, %v656
      $region80: #{_lambda_.3} parent=75 // pred_fallthru
        _
      %v661 = vld [vmem:[#allocation2] sm:$0xff]
      %v662 = vld [vmem:[#allocation2 + $0x8] sm:$0x3]
      %vm663 = vcmask 261120
      %v664 = vsel %vm663, %v661, 0.0
      %665 = vadd.xlane.f32.xlu0 %v664
      %v666 = vpop.xlane.xlu0 %665
      %vm667 = vcmask 254976
      %v668 = vsel %vm667, %v662, 0.0
      %669 = vadd.xlane.f32.xlu0 %v668
      %v670 = vpop.xlane.xlu0 %669
      %v671 = vrcp.pop 32.0
      %v672 = vmul.f32 %v666, %v671
      %v673 = vmul.f32 %v670, %v671
      %v674 = vsub.f32 %v661, %v672
      %v675 = vsub.f32 %v662, %v673
      %v676 = vmul.f32 %v674, %v674
      %v677 = vmul.f32 %v675, %v675
      %v678 = vsel %vm663, %v676, 0.0
      %679 = vadd.xlane.f32.xlu0 %v678
      %v680 = vpop.xlane.xlu0 %679
      %v681 = vsel %vm667, %v677, 0.0
      %682 = vadd.xlane.f32.xlu0 %v681
      %v683 = vpop.xlane.xlu0 %682
      %v684 = vmul.f32 %v680, %v671
      %v685 = vmul.f32 %v683, %v671
      %v686 = vadd.f32 %v684, 1e-05
      %v687 = vadd.f32 %v685, 1e-05
      %v688 = vrsqrt.pop %v686
      %v689 = vrsqrt.pop %v687
      %v690 = vmul.f32 %v674, %v688
      %v691 = vmul.f32 %v675, %v689
      %v692 = vld [vmem:[%s608] sm:$0x1]
      %v694 = vlaneseq
      %v695 = vshrl.u32 %v694, 7
      %v696 = vsub.s32 0, %v695
      %v697 = vrot.slane %v692, %v696
      %v699 = vmul.f32 %v690, %v697
      %v700 = vmul.f32 %v691, %v697
      %v701 = vld [vmem:[%s611] sm:$0x1]
      %v703 = vlaneseq
      %v704 = vshrl.u32 %v703, 7
      %v705 = vsub.s32 0, %v704
      %v706 = vrot.slane %v701, %v705
      %v708 = vadd.f32 %v699, %v706
      %v709 = vadd.f32 %v700, %v706
      %v710 = vpack.c.bf16 %v709, %v708
      %v711 = vld [vmem:[%s616] sm:$0xf]
      %v712 = vld [vmem:[%s616 + $0x4] sm:$0xf]
      %v713 = vld [vmem:[%s616 + $0x8] sm:$0xf]
      %v714 = vld [vmem:[%s616 + $0xc] sm:$0xf]
      %v715 = vld [vmem:[%s619] sm:$0x1]
      %v717 = vlaneseq
      %v718 = vshrl.u32 %v717, 7
      %v719 = vsub.s32 0, %v718
      %v720 = vrot.slane %v715, %v719
      %v726 = vunpack.c.l.b16 %v711
      %v727 = vunpack.c.l.b16 %v712
      %v728 = vunpack.c.l.b16 %v713
      %v729 = vunpack.c.l.b16 %v714
      %v730 = vpack.c.b16 %v727, %v726
      %v731 = vpack.c.b16 %v729, %v728
      %v735 = vsel %vm663, %v710, 0
      %737 = vmatprep.subr.bf16.mxu0 0
      %738 = vmatpush1.bf16.msra.mxu0 %v730
      %739 = vmatprep.subr.bf16.mxu0 0
      %740 = vmatpush1.bf16.msra.mxu0 %v731
      %741 = vmatprep.subr.bf16.mxu0 0
      %742 = vmatpush1.bf16.msra.mxu0 0
      %743 = vmatprep.subr.bf16.mxu0 0
      %744 = vmatpush1.bf16.msra.mxu0 0
      %745 = vmatprep.subr.bf16.mxu0 0
      %746 = vmatpush1.bf16.msra.mxu0 0
      %747 = vmatprep.subr.bf16.mxu0 0
      %748 = vmatpush1.bf16.msra.mxu0 0
      %749 = vmatprep.subr.bf16.mxu0 0
      %750 = vmatpush1.bf16.msra.mxu0 0
      %751 = vmatprep.subr.bf16.mxu0 0
      %752 = vmatpush1.bf16.msra.mxu0 0
      %753 = vmatprep.subr.bf16.mxu0 0
      %754 = vmatpush1.bf16.msra.mxu0 0
      %755 = vmatprep.subr.bf16.mxu0 0
      %756 = vmatpush1.bf16.msra.mxu0 0
      %757 = vmatprep.subr.bf16.mxu0 0
      %758 = vmatpush1.bf16.msra.mxu0 0
      %759 = vmatprep.subr.bf16.mxu0 0
      %760 = vmatpush1.bf16.msra.mxu0 0
      %761 = vmatprep.subr.bf16.mxu0 0
      %762 = vmatpush1.bf16.msra.mxu0 0
      %763 = vmatprep.subr.bf16.mxu0 0
      %764 = vmatpush1.bf16.msra.mxu0 0
      %765 = vmatprep.subr.bf16.mxu0 0
      %766 = vmatpush1.bf16.msra.mxu0 0
      %767 = vmatprep.subr.bf16.mxu0 0
      %768 = vmatpush1.bf16.msra.mxu0 0
      %769 = vmatprep.mubr.bf16.mxu0 0
      %770 = vmatmul.mubr.bf16.gmra.mrb[0].mxu0 %v735
      %v771 = vpop.f32.mrb[0].mxu0
      %v772 = vadd.f32 %v720, %v771
      %v773 = vpop.f32.mrb[0].mxu0
      %v774 = vpop.f32.mrb[0].mxu0
      %v775 = vadd.f32 %v720, %v774
      %v776 = vpop.f32.mrb[0].mxu0
      %777 = vdwg.mxu0
      %v778 = vld [vmem:[%s1] sm:$0xff]
      %v779 = vld [vmem:[%s1 + $0x8] sm:$0x3]
      %v780 = vld [vmem:[%s624] sm:$0xf]
      %v781 = vld [vmem:[%s624 + $0x4] sm:$0xf]
      %v782 = vld [vmem:[%s624 + $0x8] sm:$0xf]
      %v783 = vld [vmem:[%s624 + $0xc] sm:$0xf]
      %v784 = vmul.f32 %v772, 0.35355338
      %v785 = vmul.f32 %v775, 0.35355338
      %v786 = vpack.c.bf16 %v785, %v784
      %v787 = vpack.c.bf16 %v775, %v772
      %789 = vrot.lane.b32.xlu0 %v787, 96
      %v790 = vpop.permute.xlu0 %789
      %vm791 = vcmask 64512
      %v793 = vsel %vm791, %v786, 0
      %v796 = vsel %vm791, %v790, 0
      %798 = vmatprep.subr.bf16.mxu0 0
      %799 = vmatpush1.bf16.xpose.msra.mxu0 %v796
      %800 = vmatprep.subr.bf16.mxu0 0
      %801 = vmatpush1.bf16.xpose.msra.mxu0 0
      %802 = vmatprep.subr.bf16.mxu0 0
      %803 = vmatpush1.bf16.xpose.msra.mxu0 0
      %804 = vmatprep.subr.bf16.mxu0 0
      %805 = vmatpush1.bf16.xpose.msra.mxu0 0
      %806 = vmatprep.subr.bf16.mxu0 0
      %807 = vmatpush1.bf16.xpose.msra.mxu0 0
      %808 = vmatprep.subr.bf16.mxu0 0
      %809 = vmatpush1.bf16.xpose.msra.mxu0 0
      %810 = vmatprep.subr.bf16.mxu0 0
      %811 = vmatpush1.bf16.xpose.msra.mxu0 0
      %812 = vmatprep.subr.bf16.mxu0 0
      %813 = vmatpush1.bf16.xpose.msra.mxu0 0
      %814 = vmatprep.subr.bf16.mxu0 0
      %815 = vmatpush1.bf16.xpose.msra.mxu0 0
      %816 = vmatprep.subr.bf16.mxu0 0
      %817 = vmatpush1.bf16.xpose.msra.mxu0 0
      %818 = vmatprep.subr.bf16.mxu0 0
      %819 = vmatpush1.bf16.xpose.msra.mxu0 0
      %820 = vmatprep.subr.bf16.mxu0 0
      %821 = vmatpush1.bf16.xpose.msra.mxu0 0
      %822 = vmatprep.subr.bf16.mxu0 0
      %823 = vmatpush1.bf16.xpose.msra.mxu0 0
      %824 = vmatprep.subr.bf16.mxu0 0
      %825 = vmatpush1.bf16.xpose.msra.mxu0 0
      %826 = vmatprep.subr.bf16.mxu0 0
      %827 = vmatpush1.bf16.xpose.msra.mxu0 0
      %828 = vmatprep.subr.bf16.mxu0 0
      %829 = vmatpush1.bf16.xpose.msra.mxu0 0
      %830 = vmatprep.mubr.bf16.mxu0 0
      %831 = vmatmul.mubr.bf16.gmra.mrb[0].mxu0 %v793
      %v832 = vpop.f32.mrb[0].mxu0
      %v833 = vadd.f32 %v778, %v832
      %v834 = vpop.f32.mrb[0].mxu0
      %v835 = vpop.f32.mrb[0].mxu0
      %v836 = vadd.f32 %v779, %v835
      %v837 = vpop.f32.mrb[0].mxu0
      %838 = vdwg.mxu0
      %vm839 = vcmask 80896
      %v840 = vsel %vm839, %v833, -inf
      %841 = vmax.xlane.f32.xlu0 %v840
      %v842 = vpop.xlane.xlu0 %841
      %vm843 = vcmask 74752
      %v844 = vsel %vm843, %v836, -inf
      %845 = vmax.xlane.f32.xlu0 %v844
      %v846 = vpop.xlane.xlu0 %845
      %v847 = vsub.f32 %v833, %v842
      %v848 = vsub.f32 %v836, %v846
      %v849 = vmul.f32 %v847, 1.442695
      %v850 = vpow.pop %v849
      %v851 = vmul.f32 %v848, 1.442695
      %v852 = vpow.pop %v851
      %v853 = vsel %vm839, %v850, 0.0
      %854 = vadd.xlane.f32.xlu0 %v853
      %v855 = vpop.xlane.xlu0 %854
      %v856 = vsel %vm843, %v852, 0.0
      %857 = vadd.xlane.f32.xlu0 %v856
      %v858 = vpop.xlane.xlu0 %857
      %v859 = vrcp.pop %v855
      %v860 = vrcp.pop %v858
      %v861 = vmul.f32 %v850, %v859
      %v862 = vmul.f32 %v852, %v860
      %v863 = vpack.c.bf16 %v862, %v861
      %864 = vrot.lane.b32.xlu0 %v787, 64
      %v865 = vpop.permute.xlu0 %864
      %v867 = vsel %vm839, %v863, 0
      %vm869 = vcmask 1044480
      %v871 = vsel %vm869, %v865, 0
      %873 = vmatprep.subr.bf16.mxu0 0
      %874 = vmatpush1.bf16.msra.mxu0 %v871
      %875 = vmatprep.subr.bf16.mxu0 0
      %876 = vmatpush1.bf16.msra.mxu0 0
      %877 = vmatprep.subr.bf16.mxu0 0
      %878 = vmatpush1.bf16.msra.mxu0 0
      %879 = vmatprep.subr.bf16.mxu0 0
      %880 = vmatpush1.bf16.msra.mxu0 0
      %881 = vmatprep.subr.bf16.mxu0 0
      %882 = vmatpush1.bf16.msra.mxu0 0
      %883 = vmatprep.subr.bf16.mxu0 0
      %884 = vmatpush1.bf16.msra.mxu0 0
      %885 = vmatprep.subr.bf16.mxu0 0
      %886 = vmatpush1.bf16.msra.mxu0 0
      %887 = vmatprep.subr.bf16.mxu0 0
      %888 = vmatpush1.bf16.msra.mxu0 0
      %889 = vmatprep.subr.bf16.mxu0 0
      %890 = vmatpush1.bf16.msra.mxu0 0
      %891 = vmatprep.subr.bf16.mxu0 0
      %892 = vmatpush1.bf16.msra.mxu0 0
      %893 = vmatprep.subr.bf16.mxu0 0
      %894 = vmatpush1.bf16.msra.mxu0 0
      %895 = vmatprep.subr.bf16.mxu0 0
      %896 = vmatpush1.bf16.msra.mxu0 0
      %897 = vmatprep.subr.bf16.mxu0 0
      %898 = vmatpush1.bf16.msra.mxu0 0
      %899 = vmatprep.subr.bf16.mxu0 0
      %900 = vmatpush1.bf16.msra.mxu0 0
      %901 = vmatprep.subr.bf16.mxu0 0
      %902 = vmatpush1.bf16.msra.mxu0 0
      %903 = vmatprep.subr.bf16.mxu0 0
      %904 = vmatpush1.bf16.msra.mxu0 0
      %905 = vmatprep.mubr.bf16.mxu0 0
      %906 = vmatmul.mubr.bf16.gmra.mrb[0].mxu0 %v867
      %v907 = vpop.f32.mrb[0].mxu0
      %v908 = vadd.f32 0.0, %v907
      %v909 = vpop.f32.mrb[0].mxu0
      %v910 = vpop.f32.mrb[0].mxu0
      %v911 = vadd.f32 0.0, %v910
      %v912 = vpop.f32.mrb[0].mxu0
      %913 = vdwg.mxu0
      %v914 = vpack.c.bf16 %v911, %v908
      %916 = vrot.lane.b32.xlu0 %v786, 120
      %v917 = vpop.permute.xlu0 %916
      %918 = vrot.lane.b32.xlu0 %v787, 88
      %v919 = vpop.permute.xlu0 %918
      %v921 = vsel %vm791, %v917, 0
      %v924 = vsel %vm791, %v919, 0
      %926 = vmatprep.subr.bf16.mxu0 0
      %927 = vmatpush1.bf16.xpose.msra.mxu0 %v924
      %928 = vmatprep.subr.bf16.mxu0 0
      %929 = vmatpush1.bf16.xpose.msra.mxu0 0
      %930 = vmatprep.subr.bf16.mxu0 0
      %931 = vmatpush1.bf16.xpose.msra.mxu0 0
      %932 = vmatprep.subr.bf16.mxu0 0
      %933 = vmatpush1.bf16.xpose.msra.mxu0 0
      %934 = vmatprep.subr.bf16.mxu0 0
      %935 = vmatpush1.bf16.xpose.msra.mxu0 0
      %936 = vmatprep.subr.bf16.mxu0 0
      %937 = vmatpush1.bf16.xpose.msra.mxu0 0
      %938 = vmatprep.subr.bf16.mxu0 0
      %939 = vmatpush1.bf16.xpose.msra.mxu0 0
      %940 = vmatprep.subr.bf16.mxu0 0
      %941 = vmatpush1.bf16.xpose.msra.mxu0 0
      %942 = vmatprep.subr.bf16.mxu0 0
      %943 = vmatpush1.bf16.xpose.msra.mxu0 0
      %944 = vmatprep.subr.bf16.mxu0 0
      %945 = vmatpush1.bf16.xpose.msra.mxu0 0
      %946 = vmatprep.subr.bf16.mxu0 0
      %947 = vmatpush1.bf16.xpose.msra.mxu0 0
      %948 = vmatprep.subr.bf16.mxu0 0
      %949 = vmatpush1.bf16.xpose.msra.mxu0 0
      %950 = vmatprep.subr.bf16.mxu0 0
      %951 = vmatpush1.bf16.xpose.msra.mxu0 0
      %952 = vmatprep.subr.bf16.mxu0 0
      %953 = vmatpush1.bf16.xpose.msra.mxu0 0
      %954 = vmatprep.subr.bf16.mxu0 0
      %955 = vmatpush1.bf16.xpose.msra.mxu0 0
      %956 = vmatprep.subr.bf16.mxu0 0
      %957 = vmatpush1.bf16.xpose.msra.mxu0 0
      %958 = vmatprep.mubr.bf16.mxu0 0
      %959 = vmatmul.mubr.bf16.gmra.mrb[0].mxu0 %v921
      %v960 = vpop.f32.mrb[0].mxu0
      %v961 = vadd.f32 %v778, %v960
      %v962 = vpop.f32.mrb[0].mxu0
      %v963 = vpop.f32.mrb[0].mxu0
      %v964 = vadd.f32 %v779, %v963
      %v965 = vpop.f32.mrb[0].mxu0
      %966 = vdwg.mxu0
      %v967 = vsel %vm839, %v961, -inf
      %968 = vmax.xlane.f32.xlu0 %v967
      %v969 = vpop.xlane.xlu0 %968
      %v970 = vsel %vm843, %v964, -inf
      %971 = vmax.xlane.f32.xlu0 %v970
      %v972 = vpop.xlane.xlu0 %971
      %v973 = vsub.f32 %v961, %v969
      %v974 = vsub.f32 %v964, %v972
      %v975 = vmul.f32 %v973, 1.442695
      %v976 = vpow.pop %v975
      %v977 = vmul.f32 %v974, 1.442695
      %v978 = vpow.pop %v977
      %v979 = vsel %vm839, %v976, 0.0
      %980 = vadd.xlane.f32.xlu0 %v979
      %v981 = vpop.xlane.xlu0 %980
      %v982 = vsel %vm843, %v978, 0.0
      %983 = vadd.xlane.f32.xlu0 %v982
      %v984 = vpop.xlane.xlu0 %983
      %v985 = vrcp.pop %v981
      %v986 = vrcp.pop %v984
      %v987 = vmul.f32 %v976, %v985
      %v988 = vmul.f32 %v978, %v986
      %v989 = vpack.c.bf16 %v988, %v987
      %990 = vrot.lane.b32.xlu0 %v787, 56
      %v991 = vpop.permute.xlu0 %990
      %v993 = vsel %vm839, %v989, 0
      %v996 = vsel %vm869, %v991, 0
      %998 = vmatprep.subr.bf16.mxu0 0
      %999 = vmatpush1.bf16.msra.mxu0 %v996
      %1000 = vmatprep.subr.bf16.mxu0 0
      %1001 = vmatpush1.bf16.msra.mxu0 0
      %1002 = vmatprep.subr.bf16.mxu0 0
      %1003 = vmatpush1.bf16.msra.mxu0 0
      %1004 = vmatprep.subr.bf16.mxu0 0
      %1005 = vmatpush1.bf16.msra.mxu0 0
      %1006 = vmatprep.subr.bf16.mxu0 0
      %1007 = vmatpush1.bf16.msra.mxu0 0
      %1008 = vmatprep.subr.bf16.mxu0 0
      %1009 = vmatpush1.bf16.msra.mxu0 0
      %1010 = vmatprep.subr.bf16.mxu0 0
      %1011 = vmatpush1.bf16.msra.mxu0 0
      %1012 = vmatprep.subr.bf16.mxu0 0
      %1013 = vmatpush1.bf16.msra.mxu0 0
      %1014 = vmatprep.subr.bf16.mxu0 0
      %1015 = vmatpush1.bf16.msra.mxu0 0
      %1016 = vmatprep.subr.bf16.mxu0 0
      %1017 = vmatpush1.bf16.msra.mxu0 0
      %1018 = vmatprep.subr.bf16.mxu0 0
      %1019 = vmatpush1.bf16.msra.mxu0 0
      %1020 = vmatprep.subr.bf16.mxu0 0
      %1021 = vmatpush1.bf16.msra.mxu0 0
      %1022 = vmatprep.subr.bf16.mxu0 0
      %1023 = vmatpush1.bf16.msra.mxu0 0
      %1024 = vmatprep.subr.bf16.mxu0 0
      %1025 = vmatpush1.bf16.msra.mxu0 0
      %1026 = vmatprep.subr.bf16.mxu0 0
      %1027 = vmatpush1.bf16.msra.mxu0 0
      %1028 = vmatprep.subr.bf16.mxu0 0
      %1029 = vmatpush1.bf16.msra.mxu0 0
      %1030 = vmatprep.mubr.bf16.mxu0 0
      %1031 = vmatmul.mubr.bf16.gmra.mrb[0].mxu0 %v993
      %v1032 = vpop.f32.mrb[0].mxu0
      %v1033 = vadd.f32 0.0, %v1032
      %v1034 = vpop.f32.mrb[0].mxu0
      %v1035 = vpop.f32.mrb[0].mxu0
      %v1036 = vadd.f32 0.0, %v1035
      %v1037 = vpop.f32.mrb[0].mxu0
      %1038 = vdwg.mxu0
      %v1039 = vpack.c.bf16 %v1036, %v1033
      %v1041 = vsel %vm791, %v1039, 0
      %vm1043 = vcmask 1043456
      %v1045 = vsel %vm1043, %v781, 0
      %1047 = vmatprep.subr.bf16.mxu0 0
      %1048 = vmatpush1.bf16.msra.mxu0 %v1045
      %1049 = vmatprep.subr.bf16.mxu0 0
      %1050 = vmatpush1.bf16.msra.mxu0 0
      %1051 = vmatprep.subr.bf16.mxu0 0
      %1052 = vmatpush1.bf16.msra.mxu0 0
      %1053 = vmatprep.subr.bf16.mxu0 0
      %1054 = vmatpush1.bf16.msra.mxu0 0
      %1055 = vmatprep.subr.bf16.mxu0 0
      %1056 = vmatpush1.bf16.msra.mxu0 0
      %1057 = vmatprep.subr.bf16.mxu0 0
      %1058 = vmatpush1.bf16.msra.mxu0 0
      %1059 = vmatprep.subr.bf16.mxu0 0
      %1060 = vmatpush1.bf16.msra.mxu0 0
      %1061 = vmatprep.subr.bf16.mxu0 0
      %1062 = vmatpush1.bf16.msra.mxu0 0
      %1063 = vmatprep.subr.bf16.mxu0 0
      %1064 = vmatpush1.bf16.msra.mxu0 0
      %1065 = vmatprep.subr.bf16.mxu0 0
      %1066 = vmatpush1.bf16.msra.mxu0 0
      %1067 = vmatprep.subr.bf16.mxu0 0
      %1068 = vmatpush1.bf16.msra.mxu0 0
      %1069 = vmatprep.subr.bf16.mxu0 0
      %1070 = vmatpush1.bf16.msra.mxu0 0
      %1071 = vmatprep.subr.bf16.mxu0 0
      %1072 = vmatpush1.bf16.msra.mxu0 0
      %1073 = vmatprep.subr.bf16.mxu0 0
      %1074 = vmatpush1.bf16.msra.mxu0 0
      %1075 = vmatprep.subr.bf16.mxu0 0
      %1076 = vmatpush1.bf16.msra.mxu0 0
      %1077 = vmatprep.subr.bf16.mxu0 0
      %1078 = vmatpush1.bf16.msra.mxu0 0
      %1079 = vmatprep.mubr.bf16.mxu0 0
      %1080 = vmatmul.mubr.bf16.gmra.mrb[0].mxu0 %v1041
      %v1081 = vpop.f32.mrb[0].mxu0
      %v1082 = vadd.f32 0.0, %v1081
      %v1083 = vpop.f32.mrb[0].mxu0
      %v1084 = vpop.f32.mrb[0].mxu0
      %v1085 = vadd.f32 0.0, %v1084
      %v1086 = vpop.f32.mrb[0].mxu0
      %1087 = vdwg.mxu0
      %v1089 = vsel %vm791, %v914, 0
      %v1092 = vsel %vm1043, %v780, 0
      %1094 = vmatprep.subr.bf16.mxu0 0
      %1095 = vmatpush1.bf16.msra.mxu0 %v1092
      %1096 = vmatprep.subr.bf16.mxu0 0
      %1097 = vmatpush1.bf16.msra.mxu0 0
      %1098 = vmatprep.subr.bf16.mxu0 0
      %1099 = vmatpush1.bf16.msra.mxu0 0
      %1100 = vmatprep.subr.bf16.mxu0 0
      %1101 = vmatpush1.bf16.msra.mxu0 0
      %1102 = vmatprep.subr.bf16.mxu0 0
      %1103 = vmatpush1.bf16.msra.mxu0 0
      %1104 = vmatprep.subr.bf16.mxu0 0
      %1105 = vmatpush1.bf16.msra.mxu0 0
      %1106 = vmatprep.subr.bf16.mxu0 0
      %1107 = vmatpush1.bf16.msra.mxu0 0
      %1108 = vmatprep.subr.bf16.mxu0 0
      %1109 = vmatpush1.bf16.msra.mxu0 0
      %1110 = vmatprep.subr.bf16.mxu0 0
      %1111 = vmatpush1.bf16.msra.mxu0 0
      %1112 = vmatprep.subr.bf16.mxu0 0
      %1113 = vmatpush1.bf16.msra.mxu0 0
      %1114 = vmatprep.subr.bf16.mxu0 0
      %1115 = vmatpush1.bf16.msra.mxu0 0
      %1116 = vmatprep.subr.bf16.mxu0 0
      %1117 = vmatpush1.bf16.msra.mxu0 0
      %1118 = vmatprep.subr.bf16.mxu0 0
      %1119 = vmatpush1.bf16.msra.mxu0 0
      %1120 = vmatprep.subr.bf16.mxu0 0
      %1121 = vmatpush1.bf16.msra.mxu0 0
      %1122 = vmatprep.subr.bf16.mxu0 0
      %1123 = vmatpush1.bf16.msra.mxu0 0
      %1124 = vmatprep.subr.bf16.mxu0 0
      %1125 = vmatpush1.bf16.msra.mxu0 0
      %1126 = vmatprep.mubr.bf16.mxu0 0
      %1127 = vmatmul.mubr.bf16.gmra.mrb[0].mxu0 %v1089
      %v1128 = vpop.f32.mrb[0].mxu0
      %v1129 = vadd.f32 %v1082, %v1128
      %v1130 = vpop.f32.mrb[0].mxu0
      %v1131 = vpop.f32.mrb[0].mxu0
      %v1132 = vadd.f32 %v1085, %v1131
      %v1133 = vpop.f32.mrb[0].mxu0
      %1134 = vdwg.mxu0
      %1135 = vrot.lane.b32.xlu0 %v786, 112
      %v1136 = vpop.permute.xlu0 %1135
      %1137 = vrot.lane.b32.xlu0 %v787, 80
      %v1138 = vpop.permute.xlu0 %1137
      %v1140 = vsel %vm791, %v1136, 0
      %v1143 = vsel %vm791, %v1138, 0
      %1145 = vmatprep.subr.bf16.mxu0 0
      %1146 = vmatpush1.bf16.xpose.msra.mxu0 %v1143
      %1147 = vmatprep.subr.bf16.mxu0 0
      %1148 = vmatpush1.bf16.xpose.msra.mxu0 0
      %1149 = vmatprep.subr.bf16.mxu0 0
      %1150 = vmatpush1.bf16.xpose.msra.mxu0 0
      %1151 = vmatprep.subr.bf16.mxu0 0
      %1152 = vmatpush1.bf16.xpose.msra.mxu0 0
      %1153 = vmatprep.subr.bf16.mxu0 0
      %1154 = vmatpush1.bf16.xpose.msra.mxu0 0
      %1155 = vmatprep.subr.bf16.mxu0 0
      %1156 = vmatpush1.bf16.xpose.msra.mxu0 0
      %1157 = vmatprep.subr.bf16.mxu0 0
      %1158 = vmatpush1.bf16.xpose.msra.mxu0 0
      %1159 = vmatprep.subr.bf16.mxu0 0
      %1160 = vmatpush1.bf16.xpose.msra.mxu0 0
      %1161 = vmatprep.subr.bf16.mxu0 0
      %1162 = vmatpush1.bf16.xpose.msra.mxu0 0
      %1163 = vmatprep.subr.bf16.mxu0 0
      %1164 = vmatpush1.bf16.xpose.msra.mxu0 0
      %1165 = vmatprep.subr.bf16.mxu0 0
      %1166 = vmatpush1.bf16.xpose.msra.mxu0 0
      %1167 = vmatprep.subr.bf16.mxu0 0
      %1168 = vmatpush1.bf16.xpose.msra.mxu0 0
      %1169 = vmatprep.subr.bf16.mxu0 0
      %1170 = vmatpush1.bf16.xpose.msra.mxu0 0
      %1171 = vmatprep.subr.bf16.mxu0 0
      %1172 = vmatpush1.bf16.xpose.msra.mxu0 0
      %1173 = vmatprep.subr.bf16.mxu0 0
      %1174 = vmatpush1.bf16.xpose.msra.mxu0 0
      %1175 = vmatprep.subr.bf16.mxu0 0
      %1176 = vmatpush1.bf16.xpose.msra.mxu0 0
      %1177 = vmatprep.mubr.bf16.mxu0 0
      %1178 = vmatmul.mubr.bf16.gmra.mrb[0].mxu0 %v1140
      %v1179 = vpop.f32.mrb[0].mxu0
      %v1180 = vadd.f32 %v778, %v1179
      %v1181 = vpop.f32.mrb[0].mxu0
      %v1182 = vpop.f32.mrb[0].mxu0
      %v1183 = vadd.f32 %v779, %v1182
      %v1184 = vpop.f32.mrb[0].mxu0
      %1185 = vdwg.mxu0
      %v1186 = vsel %vm839, %v1180, -inf
      %1187 = vmax.xlane.f32.xlu0 %v1186
      %v1188 = vpop.xlane.xlu0 %1187
      %v1189 = vsel %vm843, %v1183, -inf
      %1190 = vmax.xlane.f32.xlu0 %v1189
      %v1191 = vpop.xlane.xlu0 %1190
      %v1192 = vsub.f32 %v1180, %v1188
      %v1193 = vsub.f32 %v1183, %v1191
      %v1194 = vmul.f32 %v1192, 1.442695
      %v1195 = vpow.pop %v1194
      %v1196 = vmul.f32 %v1193, 1.442695
      %v1197 = vpow.pop %v1196
      %v1198 = vsel %vm839, %v1195, 0.0
      %1199 = vadd.xlane.f32.xlu0 %v1198
      %v1200 = vpop.xlane.xlu0 %1199
      %v1201 = vsel %vm843, %v1197, 0.0
      %1202 = vadd.xlane.f32.xlu0 %v1201
      %v1203 = vpop.xlane.xlu0 %1202
      %v1204 = vrcp.pop %v1200
      %v1205 = vrcp.pop %v1203
      %v1206 = vmul.f32 %v1195, %v1204
      %v1207 = vmul.f32 %v1197, %v1205
      %v1208 = vpack.c.bf16 %v1207, %v1206
      %1209 = vrot.lane.b32.xlu0 %v787, 48
      %v1210 = vpop.permute.xlu0 %1209
      %v1212 = vsel %vm839, %v1208, 0
      %v1215 = vsel %vm869, %v1210, 0
      %1217 = vmatprep.subr.bf16.mxu0 0
      %1218 = vmatpush1.bf16.msra.mxu0 %v1215
      %1219 = vmatprep.subr.bf16.mxu0 0
      %1220 = vmatpush1.bf16.msra.mxu0 0
      %1221 = vmatprep.subr.bf16.mxu0 0
      %1222 = vmatpush1.bf16.msra.mxu0 0
      %1223 = vmatprep.subr.bf16.mxu0 0
      %1224 = vmatpush1.bf16.msra.mxu0 0
      %1225 = vmatprep.subr.bf16.mxu0 0
      %1226 = vmatpush1.bf16.msra.mxu0 0
      %1227 = vmatprep.subr.bf16.mxu0 0
      %1228 = vmatpush1.bf16.msra.mxu0 0
      %1229 = vmatprep.subr.bf16.mxu0 0
      %1230 = vmatpush1.bf16.msra.mxu0 0
      %1231 = vmatprep.subr.bf16.mxu0 0
      %1232 = vmatpush1.bf16.msra.mxu0 0
      %1233 = vmatprep.subr.bf16.mxu0 0
      %1234 = vmatpush1.bf16.msra.mxu0 0
      %1235 = vmatprep.subr.bf16.mxu0 0
      %1236 = vmatpush1.bf16.msra.mxu0 0
      %1237 = vmatprep.subr.bf16.mxu0 0
      %1238 = vmatpush1.bf16.msra.mxu0 0
      %1239 = vmatprep.subr.bf16.mxu0 0
      %1240 = vmatpush1.bf16.msra.mxu0 0
      %1241 = vmatprep.subr.bf16.mxu0 0
      %1242 = vmatpush1.bf16.msra.mxu0 0
      %1243 = vmatprep.subr.bf16.mxu0 0
      %1244 = vmatpush1.bf16.msra.mxu0 0
      %1245 = vmatprep.subr.bf16.mxu0 0
      %1246 = vmatpush1.bf16.msra.mxu0 0
      %1247 = vmatprep.subr.bf16.mxu0 0
      %1248 = vmatpush1.bf16.msra.mxu0 0
      %1249 = vmatprep.mubr.bf16.mxu0 0
      %1250 = vmatmul.mubr.bf16.gmra.mrb[0].mxu0 %v1212
      %v1251 = vpop.f32.mrb[0].mxu0
      %v1252 = vadd.f32 0.0, %v1251
      %v1253 = vpop.f32.mrb[0].mxu0
      %v1254 = vpop.f32.mrb[0].mxu0
      %v1255 = vadd.f32 0.0, %v1254
      %v1256 = vpop.f32.mrb[0].mxu0
      %1257 = vdwg.mxu0
      %v1258 = vpack.c.bf16 %v1255, %v1252
      %v1260 = vsel %vm791, %v1258, 0
      %v1263 = vsel %vm1043, %v782, 0
      %1265 = vmatprep.subr.bf16.mxu0 0
      %1266 = vmatpush1.bf16.msra.mxu0 %v1263
      %1267 = vmatprep.subr.bf16.mxu0 0
      %1268 = vmatpush1.bf16.msra.mxu0 0
      %1269 = vmatprep.subr.bf16.mxu0 0
      %1270 = vmatpush1.bf16.msra.mxu0 0
      %1271 = vmatprep.subr.bf16.mxu0 0
      %1272 = vmatpush1.bf16.msra.mxu0 0
      %1273 = vmatprep.subr.bf16.mxu0 0
      %1274 = vmatpush1.bf16.msra.mxu0 0
      %1275 = vmatprep.subr.bf16.mxu0 0
      %1276 = vmatpush1.bf16.msra.mxu0 0
      %1277 = vmatprep.subr.bf16.mxu0 0
      %1278 = vmatpush1.bf16.msra.mxu0 0
      %1279 = vmatprep.subr.bf16.mxu0 0
      %1280 = vmatpush1.bf16.msra.mxu0 0
      %1281 = vmatprep.subr.bf16.mxu0 0
      %1282 = vmatpush1.bf16.msra.mxu0 0
      %1283 = vmatprep.subr.bf16.mxu0 0
      %1284 = vmatpush1.bf16.msra.mxu0 0
      %1285 = vmatprep.subr.bf16.mxu0 0
      %1286 = vmatpush1.bf16.msra.mxu0 0
      %1287 = vmatprep.subr.bf16.mxu0 0
      %1288 = vmatpush1.bf16.msra.mxu0 0
      %1289 = vmatprep.subr.bf16.mxu0 0
      %1290 = vmatpush1.bf16.msra.mxu0 0
      %1291 = vmatprep.subr.bf16.mxu0 0
      %1292 = vmatpush1.bf16.msra.mxu0 0
      %1293 = vmatprep.subr.bf16.mxu0 0
      %1294 = vmatpush1.bf16.msra.mxu0 0
      %1295 = vmatprep.subr.bf16.mxu0 0
      %1296 = vmatpush1.bf16.msra.mxu0 0
      %1297 = vmatprep.mubr.bf16.mxu0 0
      %1298 = vmatmul.mubr.bf16.gmra.mrb[0].mxu0 %v1260
      %v1299 = vpop.f32.mrb[0].mxu0
      %v1300 = vadd.f32 0.0, %v1299
      %v1301 = vpop.f32.mrb[0].mxu0
      %v1302 = vpop.f32.mrb[0].mxu0
      %v1303 = vadd.f32 0.0, %v1302
      %v1304 = vpop.f32.mrb[0].mxu0
      %1305 = vdwg.mxu0
      %v1306 = vadd.f32 %v1129, %v1300
      %v1307 = vadd.f32 %v1132, %v1303
      %1308 = vrot.lane.b32.xlu0 %v786, 104
      %v1309 = vpop.permute.xlu0 %1308
      %1310 = vrot.lane.b32.xlu0 %v787, 72
      %v1311 = vpop.permute.xlu0 %1310
      %v1313 = vsel %vm791, %v1309, 0
      %v1316 = vsel %vm791, %v1311, 0
      %1318 = vmatprep.subr.bf16.mxu0 0
      %1319 = vmatpush1.bf16.xpose.msra.mxu0 %v1316
      %1320 = vmatprep.subr.bf16.mxu0 0
      %1321 = vmatpush1.bf16.xpose.msra.mxu0 0
      %1322 = vmatprep.subr.bf16.mxu0 0
      %1323 = vmatpush1.bf16.xpose.msra.mxu0 0
      %1324 = vmatprep.subr.bf16.mxu0 0
      %1325 = vmatpush1.bf16.xpose.msra.mxu0 0
      %1326 = vmatprep.subr.bf16.mxu0 0
      %1327 = vmatpush1.bf16.xpose.msra.mxu0 0
      %1328 = vmatprep.subr.bf16.mxu0 0
      %1329 = vmatpush1.bf16.xpose.msra.mxu0 0
      %1330 = vmatprep.subr.bf16.mxu0 0
      %1331 = vmatpush1.bf16.xpose.msra.mxu0 0
      %1332 = vmatprep.subr.bf16.mxu0 0
      %1333 = vmatpush1.bf16.xpose.msra.mxu0 0
      %1334 = vmatprep.subr.bf16.mxu0 0
      %1335 = vmatpush1.bf16.xpose.msra.mxu0 0
      %1336 = vmatprep.subr.bf16.mxu0 0
      %1337 = vmatpush1.bf16.xpose.msra.mxu0 0
      %1338 = vmatprep.subr.bf16.mxu0 0
      %1339 = vmatpush1.bf16.xpose.msra.mxu0 0
      %1340 = vmatprep.subr.bf16.mxu0 0
      %1341 = vmatpush1.bf16.xpose.msra.mxu0 0
      %1342 = vmatprep.subr.bf16.mxu0 0
      %1343 = vmatpush1.bf16.xpose.msra.mxu0 0
      %1344 = vmatprep.subr.bf16.mxu0 0
      %1345 = vmatpush1.bf16.xpose.msra.mxu0 0
      %1346 = vmatprep.subr.bf16.mxu0 0
      %1347 = vmatpush1.bf16.xpose.msra.mxu0 0
      %1348 = vmatprep.subr.bf16.mxu0 0
      %1349 = vmatpush1.bf16.xpose.msra.mxu0 0
      %1350 = vmatprep.mubr.bf16.mxu0 0
      %1351 = vmatmul.mubr.bf16.gmra.mrb[0].mxu0 %v1313
      %v1352 = vpop.f32.mrb[0].mxu0
      %v1353 = vadd.f32 %v778, %v1352
      %v1354 = vpop.f32.mrb[0].mxu0
      %v1355 = vpop.f32.mrb[0].mxu0
      %v1356 = vadd.f32 %v779, %v1355
      %v1357 = vpop.f32.mrb[0].mxu0
      %1358 = vdwg.mxu0
      %v1359 = vsel %vm839, %v1353, -inf
      %1360 = vmax.xlane.f32.xlu0 %v1359
      %v1361 = vpop.xlane.xlu0 %1360
      %v1362 = vsel %vm843, %v1356, -inf
      %1363 = vmax.xlane.f32.xlu0 %v1362
      %v1364 = vpop.xlane.xlu0 %1363
      %v1365 = vsub.f32 %v1353, %v1361
      %v1366 = vsub.f32 %v1356, %v1364
      %v1367 = vmul.f32 %v1365, 1.442695
      %v1368 = vpow.pop %v1367
      %v1369 = vmul.f32 %v1366, 1.442695
      %v1370 = vpow.pop %v1369
      %v1371 = vsel %vm839, %v1368, 0.0
      %1372 = vadd.xlane.f32.xlu0 %v1371
      %v1373 = vpop.xlane.xlu0 %1372
      %v1374 = vsel %vm843, %v1370, 0.0
      %1375 = vadd.xlane.f32.xlu0 %v1374
      %v1376 = vpop.xlane.xlu0 %1375
      %v1377 = vrcp.pop %v1373
      %v1378 = vrcp.pop %v1376
      %v1379 = vmul.f32 %v1368, %v1377
      %v1380 = vmul.f32 %v1370, %v1378
      %v1381 = vpack.c.bf16 %v1380, %v1379
      %1382 = vrot.lane.b32.xlu0 %v787, 40
      %v1383 = vpop.permute.xlu0 %1382
      %v1385 = vsel %vm839, %v1381, 0
      %v1388 = vsel %vm869, %v1383, 0
      %1390 = vmatprep.subr.bf16.mxu0 0
      %1391 = vmatpush1.bf16.msra.mxu0 %v1388
      %1392 = vmatprep.subr.bf16.mxu0 0
      %1393 = vmatpush1.bf16.msra.mxu0 0
      %1394 = vmatprep.subr.bf16.mxu0 0
      %1395 = vmatpush1.bf16.msra.mxu0 0
      %1396 = vmatprep.subr.bf16.mxu0 0
      %1397 = vmatpush1.bf16.msra.mxu0 0
      %1398 = vmatprep.subr.bf16.mxu0 0
      %1399 = vmatpush1.bf16.msra.mxu0 0
      %1400 = vmatprep.subr.bf16.mxu0 0
      %1401 = vmatpush1.bf16.msra.mxu0 0
      %1402 = vmatprep.subr.bf16.mxu0 0
      %1403 = vmatpush1.bf16.msra.mxu0 0
      %1404 = vmatprep.subr.bf16.mxu0 0
      %1405 = vmatpush1.bf16.msra.mxu0 0
      %1406 = vmatprep.subr.bf16.mxu0 0
      %1407 = vmatpush1.bf16.msra.mxu0 0
      %1408 = vmatprep.subr.bf16.mxu0 0
      %1409 = vmatpush1.bf16.msra.mxu0 0
      %1410 = vmatprep.subr.bf16.mxu0 0
      %1411 = vmatpush1.bf16.msra.mxu0 0
      %1412 = vmatprep.subr.bf16.mxu0 0
      %1413 = vmatpush1.bf16.msra.mxu0 0
      %1414 = vmatprep.subr.bf16.mxu0 0
      %1415 = vmatpush1.bf16.msra.mxu0 0
      %1416 = vmatprep.subr.bf16.mxu0 0
      %1417 = vmatpush1.bf16.msra.mxu0 0
      %1418 = vmatprep.subr.bf16.mxu0 0
      %1419 = vmatpush1.bf16.msra.mxu0 0
      %1420 = vmatprep.subr.bf16.mxu0 0
      %1421 = vmatpush1.bf16.msra.mxu0 0
      %1422 = vmatprep.mubr.bf16.mxu0 0
      %1423 = vmatmul.mubr.bf16.gmra.mrb[0].mxu0 %v1385
      %v1424 = vpop.f32.mrb[0].mxu0
      %v1425 = vadd.f32 0.0, %v1424
      %v1426 = vpop.f32.mrb[0].mxu0
      %v1427 = vpop.f32.mrb[0].mxu0
      %v1428 = vadd.f32 0.0, %v1427
      %v1429 = vpop.f32.mrb[0].mxu0
      %1430 = vdwg.mxu0
      %v1431 = vpack.c.bf16 %v1428, %v1425
      %v1433 = vsel %vm791, %v1431, 0
      %v1436 = vsel %vm1043, %v783, 0
      %1438 = vmatprep.subr.bf16.mxu0 0
      %1439 = vmatpush1.bf16.msra.mxu0 %v1436
      %1440 = vmatprep.subr.bf16.mxu0 0
      %1441 = vmatpush1.bf16.msra.mxu0 0
      %1442 = vmatprep.subr.bf16.mxu0 0
      %1443 = vmatpush1.bf16.msra.mxu0 0
      %1444 = vmatprep.subr.bf16.mxu0 0
      %1445 = vmatpush1.bf16.msra.mxu0 0
      %1446 = vmatprep.subr.bf16.mxu0 0
      %1447 = vmatpush1.bf16.msra.mxu0 0
      %1448 = vmatprep.subr.bf16.mxu0 0
      %1449 = vmatpush1.bf16.msra.mxu0 0
      %1450 = vmatprep.subr.bf16.mxu0 0
      %1451 = vmatpush1.bf16.msra.mxu0 0
      %1452 = vmatprep.subr.bf16.mxu0 0
      %1453 = vmatpush1.bf16.msra.mxu0 0
      %1454 = vmatprep.subr.bf16.mxu0 0
      %1455 = vmatpush1.bf16.msra.mxu0 0
      %1456 = vmatprep.subr.bf16.mxu0 0
      %1457 = vmatpush1.bf16.msra.mxu0 0
      %1458 = vmatprep.subr.bf16.mxu0 0
      %1459 = vmatpush1.bf16.msra.mxu0 0
      %1460 = vmatprep.subr.bf16.mxu0 0
      %1461 = vmatpush1.bf16.msra.mxu0 0
      %1462 = vmatprep.subr.bf16.mxu0 0
      %1463 = vmatpush1.bf16.msra.mxu0 0
      %1464 = vmatprep.subr.bf16.mxu0 0
      %1465 = vmatpush1.bf16.msra.mxu0 0
      %1466 = vmatprep.subr.bf16.mxu0 0
      %1467 = vmatpush1.bf16.msra.mxu0 0
      %1468 = vmatprep.subr.bf16.mxu0 0
      %1469 = vmatpush1.bf16.msra.mxu0 0
      %1470 = vmatprep.mubr.bf16.mxu0 0
      %1471 = vmatmul.mubr.bf16.gmra.mrb[0].mxu0 %v1433
      %v1472 = vpop.f32.mrb[0].mxu0
      %v1473 = vadd.f32 0.0, %v1472
      %v1474 = vpop.f32.mrb[0].mxu0
      %v1475 = vpop.f32.mrb[0].mxu0
      %v1476 = vadd.f32 0.0, %v1475
      %v1477 = vpop.f32.mrb[0].mxu0
      %1478 = vdwg.mxu0
      %v1479 = vadd.f32 %v1306, %v1473
      %v1480 = vadd.f32 %v1307, %v1476
      %v1481 = vld [vmem:[%s627] sm:$0x1]
      %v1483 = vlaneseq
      %v1484 = vshrl.u32 %v1483, 7
      %v1485 = vsub.s32 0, %v1484
      %v1486 = vrot.slane %v1481, %v1485
      %v1488 = vadd.f32 %v1479, %v1486
      %v1489 = vadd.f32 %v1480, %v1486
      %v1490 = vadd.f32 %v661, %v1488
      %v1491 = vadd.f32 %v662, %v1489
      %v1492 = vsel %vm663, %v1490, 0.0
      %1493 = vadd.xlane.f32.xlu0 %v1492
      %v1494 = vpop.xlane.xlu0 %1493
      %v1495 = vsel %vm667, %v1491, 0.0
      %1496 = vadd.xlane.f32.xlu0 %v1495
      %v1497 = vpop.xlane.xlu0 %1496
      %v1498 = vmul.f32 %v1494, %v671
      %v1499 = vmul.f32 %v1497, %v671
      %v1500 = vsub.f32 %v1490, %v1498
      %v1501 = vsub.f32 %v1491, %v1499
      %v1502 = vmul.f32 %v1500, %v1500
      %v1503 = vmul.f32 %v1501, %v1501
      %v1504 = vsel %vm663, %v1502, 0.0
      %1505 = vadd.xlane.f32.xlu0 %v1504
      %v1506 = vpop.xlane.xlu0 %1505
      %v1507 = vsel %vm667, %v1503, 0.0
      %1508 = vadd.xlane.f32.xlu0 %v1507
      %v1509 = vpop.xlane.xlu0 %1508
      %v1510 = vmul.f32 %v1506, %v671
      %v1511 = vmul.f32 %v1509, %v671
      %v1512 = vadd.f32 %v1510, 1e-05
      %v1513 = vadd.f32 %v1511, 1e-05
      %v1514 = vrsqrt.pop %v1512
      %v1515 = vrsqrt.pop %v1513
      %v1516 = vmul.f32 %v1500, %v1514
      %v1517 = vmul.f32 %v1501, %v1515
      %v1518 = vld [vmem:[%s630] sm:$0x1]
      %v1520 = vlaneseq
      %v1521 = vshrl.u32 %v1520, 7
      %v1522 = vsub.s32 0, %v1521
      %v1523 = vrot.slane %v1518, %v1522
      %v1525 = vmul.f32 %v1516, %v1523
      %v1526 = vmul.f32 %v1517, %v1523
      %v1527 = vld [vmem:[%s633] sm:$0x1]
      %v1529 = vlaneseq
      %v1530 = vshrl.u32 %v1529, 7
      %v1531 = vsub.s32 0, %v1530
      %v1532 = vrot.slane %v1527, %v1531
      %v1534 = vadd.f32 %v1525, %v1532
      %v1535 = vadd.f32 %v1526, %v1532
      %v1536 = vpack.c.bf16 %v1535, %v1534
      %v1537 = vld [vmem:[%s638] sm:$0xf]
      %v1538 = vld [vmem:[%s638 + $0x4] sm:$0xf]
      %v1539 = vld [vmem:[%s638 + $0x8] sm:$0xf]
      %v1540 = vld [vmem:[%s638 + $0xc] sm:$0xf]
      %v1541 = vld [vmem:[%s641] sm:$0x1]
      %v1543 = vlaneseq
      %v1544 = vshrl.u32 %v1543, 7
      %v1545 = vsub.s32 0, %v1544
      %v1546 = vrot.slane %v1541, %v1545
      %v1552 = vunpack.c.l.b16 %v1537
      %v1553 = vunpack.c.l.b16 %v1538
      %v1554 = vunpack.c.l.b16 %v1539
      %v1555 = vunpack.c.l.b16 %v1540
      %v1556 = vpack.c.b16 %v1553, %v1552
      %v1557 = vpack.c.b16 %v1555, %v1554
      %v1561 = vsel %vm663, %v1536, 0
      %1563 = vmatprep.subr.bf16.mxu0 0
      %1564 = vmatpush1.bf16.msra.mxu0 %v1556
      %1565 = vmatprep.subr.bf16.mxu0 0
      %1566 = vmatpush1.bf16.msra.mxu0 %v1557
      %1567 = vmatprep.subr.bf16.mxu0 0
      %1568 = vmatpush1.bf16.msra.mxu0 0
      %1569 = vmatprep.subr.bf16.mxu0 0
      %1570 = vmatpush1.bf16.msra.mxu0 0
      %1571 = vmatprep.subr.bf16.mxu0 0
      %1572 = vmatpush1.bf16.msra.mxu0 0
      %1573 = vmatprep.subr.bf16.mxu0 0
      %1574 = vmatpush1.bf16.msra.mxu0 0
      %1575 = vmatprep.subr.bf16.mxu0 0
      %1576 = vmatpush1.bf16.msra.mxu0 0
      %1577 = vmatprep.subr.bf16.mxu0 0
      %1578 = vmatpush1.bf16.msra.mxu0 0
      %1579 = vmatprep.subr.bf16.mxu0 0
      %1580 = vmatpush1.bf16.msra.mxu0 0
      %1581 = vmatprep.subr.bf16.mxu0 0
      %1582 = vmatpush1.bf16.msra.mxu0 0
      %1583 = vmatprep.subr.bf16.mxu0 0
      %1584 = vmatpush1.bf16.msra.mxu0 0
      %1585 = vmatprep.subr.bf16.mxu0 0
      %1586 = vmatpush1.bf16.msra.mxu0 0
      %1587 = vmatprep.subr.bf16.mxu0 0
      %1588 = vmatpush1.bf16.msra.mxu0 0
      %1589 = vmatprep.subr.bf16.mxu0 0
      %1590 = vmatpush1.bf16.msra.mxu0 0
      %1591 = vmatprep.subr.bf16.mxu0 0
      %1592 = vmatpush1.bf16.msra.mxu0 0
      %1593 = vmatprep.subr.bf16.mxu0 0
      %1594 = vmatpush1.bf16.msra.mxu0 0
      %1595 = vmatprep.mubr.bf16.mxu0 0
      %1596 = vmatmul.mubr.bf16.gmra.mrb[0].mxu0 %v1561
      %v1597 = vpop.f32.mrb[0].mxu0
      %v1598 = vadd.f32 %v1546, %v1597
      %v1599 = vpop.f32.mrb[0].mxu0
      %v1600 = vpop.f32.mrb[0].mxu0
      %v1601 = vadd.f32 %v1546, %v1600
      %v1602 = vpop.f32.mrb[0].mxu0
      %1603 = vdwg.mxu0
      %v1604 = vmul.f32 %v1598, 1.702
      %v1605 = vmul.f32 %v1601, 1.702
      %v1606 = vxor.u32 %v1604, 2147483648
      %v1607 = vxor.u32 %v1605, 2147483648
      %v1608 = vmul.f32 %v1606, 1.442695
      %v1609 = vpow.pop %v1608
      %v1610 = vmul.f32 %v1607, 1.442695
      %v1611 = vpow.pop %v1610
      %v1612 = vadd.f32 %v1609, 1.0
      %v1613 = vadd.f32 %v1611, 1.0
      %v1614 = vrcp.pop %v1612
      %v1615 = vmul.f32 1.0, %v1614
      %v1616 = vrcp.pop %v1613
      %v1617 = vmul.f32 1.0, %v1616
      %v1618 = vmul.f32 %v1598, %v1615
      %v1619 = vmul.f32 %v1601, %v1617
      %v1620 = vpack.c.bf16 %v1619, %v1618
      %v1621 = vld [vmem:[%s646] sm:$0xf]
      %v1622 = vld [vmem:[%s646 + $0x4] sm:$0xf]
      %v1623 = vld [vmem:[%s646 + $0x8] sm:$0xf]
      %v1624 = vld [vmem:[%s646 + $0xc] sm:$0xf]
      %v1625 = vld [vmem:[%s646 + $0x10] sm:$0xf]
      %v1626 = vld [vmem:[%s646 + $0x14] sm:$0xf]
      %v1627 = vld [vmem:[%s646 + $0x18] sm:$0xf]
      %v1628 = vld [vmem:[%s646 + $0x1c] sm:$0xf]
      %v1629 = vld [vmem:[%s649] sm:$0x1]
      %v1631 = vlaneseq
      %v1632 = vshrl.u32 %v1631, 7
      %v1633 = vsub.s32 0, %v1632
      %v1634 = vrot.slane %v1629, %v1633
      %v1644 = vunpack.c.l.b16 %v1621
      %v1645 = vunpack.c.l.b16 %v1622
      %v1646 = vunpack.c.l.b16 %v1623
      %v1647 = vunpack.c.l.b16 %v1624
      %v1648 = vunpack.c.l.b16 %v1625
      %v1649 = vunpack.c.l.b16 %v1626
      %v1650 = vunpack.c.l.b16 %v1627
      %v1651 = vunpack.c.l.b16 %v1628
      %v1652 = vpack.c.b16 %v1645, %v1644
      %v1653 = vpack.c.b16 %v1647, %v1646
      %v1654 = vpack.c.b16 %v1649, %v1648
      %v1655 = vpack.c.b16 %v1651, %v1650
      %vm1660 = vcmask 523264
      %v1662 = vsel %vm1660, %v1620, 0
      %1664 = vmatprep.subr.bf16.mxu0 0
      %1665 = vmatpush1.bf16.msra.mxu0 %v1652
      %1666 = vmatprep.subr.bf16.mxu0 0
      %1667 = vmatpush1.bf16.msra.mxu0 %v1653
      %1668 = vmatprep.subr.bf16.mxu0 0
      %1669 = vmatpush1.bf16.msra.mxu0 %v1654
      %1670 = vmatprep.subr.bf16.mxu0 0
      %1671 = vmatpush1.bf16.msra.mxu0 %v1655
      %1672 = vmatprep.subr.bf16.mxu0 0
      %1673 = vmatpush1.bf16.msra.mxu0 0
      %1674 = vmatprep.subr.bf16.mxu0 0
      %1675 = vmatpush1.bf16.msra.mxu0 0
      %1676 = vmatprep.subr.bf16.mxu0 0
      %1677 = vmatpush1.bf16.msra.mxu0 0
      %1678 = vmatprep.subr.bf16.mxu0 0
      %1679 = vmatpush1.bf16.msra.mxu0 0
      %1680 = vmatprep.subr.bf16.mxu0 0
      %1681 = vmatpush1.bf16.msra.mxu0 0
      %1682 = vmatprep.subr.bf16.mxu0 0
      %1683 = vmatpush1.bf16.msra.mxu0 0
      %1684 = vmatprep.subr.bf16.mxu0 0
      %1685 = vmatpush1.bf16.msra.mxu0 0
      %1686 = vmatprep.subr.bf16.mxu0 0
      %1687 = vmatpush1.bf16.msra.mxu0 0
      %1688 = vmatprep.subr.bf16.mxu0 0
      %1689 = vmatpush1.bf16.msra.mxu0 0
      %1690 = vmatprep.subr.bf16.mxu0 0
      %1691 = vmatpush1.bf16.msra.mxu0 0
      %1692 = vmatprep.subr.bf16.mxu0 0
      %1693 = vmatpush1.bf16.msra.mxu0 0
      %1694 = vmatprep.subr.bf16.mxu0 0
      %1695 = vmatpush1.bf16.msra.mxu0 0
      %1696 = vmatprep.mubr.bf16.mxu0 0
      %1697 = vmatmul.mubr.bf16.gmra.mrb[0].mxu0 %v1662
      %v1698 = vpop.f32.mrb[0].mxu0
      %v1699 = vadd.f32 %v1634, %v1698
      %v1700 = vpop.f32.mrb[0].mxu0
      %v1701 = vpop.f32.mrb[0].mxu0
      %v1702 = vadd.f32 %v1634, %v1701
      %v1703 = vpop.f32.mrb[0].mxu0
      %1704 = vdwg.mxu0
      %v1705 = vadd.f32 %v1490, %v1699
      %v1706 = vadd.f32 %v1491, %v1702
      %1707 = vst.msk [vmem:[#allocation2] sm:$0xff] %vm663, %v1705
      %1708 = vst.msk [vmem:[#allocation2 + $0x8] sm:$0x3] %vm667, %v1706
      %p1709 = scmp.eq.s32.totalorder %s27, 17
      // Predicated region
      $region81: #{_lambda_.3} parent=75 // pred_check
        %p1710 = pneg %p1709
      $region82: #{_lambda_.3} parent=75 // pred_check_branch
        %1712 = sbr.rel (%p1710) target = $region84
      $region83: #{_lambda_.3} parent=75 // pred_region
        %1713 = vst.msk [vmem:[%s14] sm:$0xff] %vm663, %v1705
        %1714 = vst.msk [vmem:[%s14 + $0x8] sm:$0x3] %vm667, %v1706
      $region84: #{_lambda_.3} parent=75 // pred_fallthru
        _
      %p1715 = scmp.eq.s32.totalorder %s27, 22
      // Predicated region
      $region85: #{_lambda_.3} parent=75 // pred_check
        %p1716 = pneg %p1715
      $region86: #{_lambda_.3} parent=75 // pred_check_branch
        %1718 = sbr.rel (%p1716) target = $region88
      $region87: #{_lambda_.3} parent=75 // pred_region
        %1719 = vst.msk [vmem:[%s15] sm:$0xff] %vm663, %v1705
        %1720 = vst.msk [vmem:[%s15 + $0x8] sm:$0x3] %vm667, %v1706
      $region88: #{_lambda_.3} parent=75 // pred_fallthru
        _
      // Predicated region
      $region89: #{_lambda_.3} parent=75 // pred_check
        %p1721 = pneg %p394
      $region90: #{_lambda_.3} parent=75 // pred_check_branch
        %1723 = sbr.rel (%p1721) target = $region92
      $region91: #{_lambda_.3} parent=75 // pred_region
        _
      $region92: #{_lambda_.3} parent=75 // pred_fallthru
        _
      // Predicated region
      $region93: #{_lambda_.3} parent=75 // pred_check
        %p1724 = pneg %p415
      $region94: #{_lambda_.3} parent=75 // pred_check_branch
        %1726 = sbr.rel (%p1724) target = $region96
      $region95: #{_lambda_.3} parent=75 // pred_region
        _
      $region96: #{_lambda_.3} parent=75 // pred_fallthru
        _
      // Predicated region
      $region97: #{_lambda_.3} parent=75 // pred_check
        %p1727 = pneg %p394
      $region98: #{_lambda_.3} parent=75 // pred_check_branch
        %1729 = sbr.rel (%p1727) target = $region100
      $region99: #{_lambda_.3} parent=75 // pred_region
        _
      $region100: #{_lambda_.3} parent=75 // pred_fallthru
        _
      // Predicated region
      $region101: #{_lambda_.3} parent=75 // pred_check
        %p1730 = pneg %p415
      $region102: #{_lambda_.3} parent=75 // pred_check_branch
        %1732 = sbr.rel (%p1730) target = $region104
      $region103: #{_lambda_.3} parent=75 // pred_region
        _
      $region104: #{_lambda_.3} parent=75 // pred_fallthru
        _
    $region76: #{_lambda_.3} parent=5 // pred_fallthru
      _
    %p1733 = scmp.le.s32.totalorder 2, %s22
    // Predicated region
    $region105: #{_lambda_.3} parent=5 // pred_check
      %p1734 = pneg %p1733
    $region106: #{_lambda_.3} parent=5 // pred_check_branch
      %1736 = sbr.rel (%p1734) target = $region108
    $region107: #{_lambda_.3} parent=5 // pred_region
      %s1737 = ssub.s32 %s22, 2
    $region108: #{_lambda_.3} parent=5 // pred_fallthru
      _
  $region6: #{_lambda_.3} parent=0 // loop_footer
    %s26 = sadd.s32 1, %s22
  $region7: #{_lambda_.3} parent=0 // loop_footer_branch
    %21 = sbr.rel target = $region3
  $region8: #{_lambda_.3} parent=0 // loop_exit
    _

</llo_original>
